<compile_context>
chip_gen: v6e
topology: v6e:2x2x1
jax: 0.10.0
libtpu: 0.0.40
codegen_flags: <defaults>
</compile_context>

<pallas_src>
import jax
import jax.numpy as jnp
from jax.experimental import pallas as pl
from jax.experimental.pallas import tpu as pltpu

EPS = 1e-6


def _round_up(x, m):
    return ((x + m - 1) // m) * m


def _sublayer_connection_kernel(x_ref, w_ref, b_ref, o_ref):
    """One (row_tile, D) slab: pre-LayerNorm -> Linear (MXU) -> residual add."""
    x_in = x_ref[...]
    # Only cast when needed (bf16 inputs would otherwise double live vreg bytes).
    x = x_in if x_in.dtype == jnp.float32 else x_in.astype(jnp.float32)
    d = x.shape[-1]

    # --- LayerNorm statistics: single pass, f32 on the VPU ---
    s1 = jnp.sum(x, axis=-1, keepdims=True)
    s2 = jnp.sum(x * x, axis=-1, keepdims=True)
    mean = s1 * (1.0 / d)
    # Unbiased variance (/(D-1)) to match torch.Tensor.std(); clamp tiny negative
    # values from cancellation before the sqrt. eps is added to std (module spec).
    var = jnp.maximum((s2 - s1 * mean) * (1.0 / (d - 1)), 0.0)
    std = jnp.sqrt(var)
    # Exact reciprocal: kernel is DMA-bound, so approx=True buys nothing here.
    inv_std = pl.reciprocal(std + EPS, approx=False)
    # gamma / beta are folded into w'/b' outside the kernel, so only scale here.
    normed = (x - mean) * inv_std

    # --- sublayer Linear(D, D) on the MXU: bf16 operands, f32 accumulation ---
    y = jnp.dot(normed.astype(w_ref.dtype), w_ref[...],
                preferred_element_type=jnp.float32) + b_ref[...]

    # --- dropout (eval mode: identity) + residual ---
    # TODO(synk): training-mode stochastic dropout (pltpu.prng_seed / prng_random_bits,
    #             seeded per grid step) is not implemented here.
    o_ref[...] = (x + y).astype(o_ref.dtype)


def fold_sublayer_params(gamma, beta, w, b, *, mxu_dtype=jnp.bfloat16):
    """Fold the LayerNorm affine into the Linear sublayer weights.

    Call ONCE at parameter load / init (not per forward call):
        (gamma * n + beta) @ W + b  ==  n @ (gamma[:, None] * W)  +  (beta @ W + b)
    """
    g32 = gamma.astype(jnp.float32)
    w32 = w.astype(jnp.float32)
    w_folded = (g32[:, None] * w32).astype(mxu_dtype)
    b_folded = (beta.astype(jnp.float32) @ w32 + b.astype(jnp.float32)).reshape(1, -1)
    return w_folded, b_folded


def sublayer_connection(x, w_folded, b_folded, *, row_tile=None):
    """x: [B, T, D]; w_folded: [D, D]; b_folded: [1, D] (from fold_sublayer_params).

    Output dtype follows x: pass bf16 activations to halve the streamed I/O bytes
    (LayerNorm statistics stay in f32 inside the kernel either way).
    """
    B, T, D = x.shape
    rows = B * T
    x2 = x.reshape(rows, D)

    if row_tile is None:
        if rows <= 8:
            # Single full-extent block (block dim == array dim is always legal).
            row_tile = rows
        else:
            # At least 2 balanced tiles so v7x's two TensorCores both get real work
            # (e.g. rows=300 -> row_tile=152 -> 152/148 real rows per core); cap each
            # tile near 256 rows; keep a multiple of 8 (sublane).
            n_tiles = max(2, pl.cdiv(rows, 256))
            row_tile = _round_up(pl.cdiv(rows, n_tiles), 8)

    grid = pl.cdiv(rows, row_tile)  # ragged last block; Pallas masks the tail store

    out2 = pl.pallas_call(
        _sublayer_connection_kernel,
        out_shape=jax.ShapeDtypeStruct((rows, D), x.dtype),
        grid_spec=pltpu.PrefetchScalarGridSpec(
            num_scalar_prefetch=0,
            grid=(grid,),
            in_specs=[
                # Streamed x tiles: default double-buffering is enough for short grids.
                pl.BlockSpec((row_tile, D), lambda i: (i, 0)),
                # Folded weight: constant index map -> fetched once, resident (bf16).
                # NOTE: at much larger D, single-buffer this (or K-tile) to respect
                # v7x's 64 MiB physical VMEM.
                pl.BlockSpec((D, D), lambda i: (0, 0)),
                pl.BlockSpec((1, D), lambda i: (0, 0)),
            ],
            out_specs=pl.BlockSpec((row_tile, D), lambda i: (i, 0)),
        ),
        compiler_params=pltpu.CompilerParams(
            dimension_semantics=("parallel",),   # shards the row tiles across v7x's 2 TCs
            vmem_limit_bytes=32 * 1024 * 1024,   # explicit scoped-VMEM budget (safe on v5e/v6e/v7x)
        ),
    )(x2, w_folded, b_folded)

    return out2.reshape(B, T, D)


def _reference(x, gamma, beta, w, b):
    xf = x.astype(jnp.float32)
    d = xf.shape[-1]
    mean = jnp.mean(xf, axis=-1, keepdims=True)
    c = xf - mean
    std = jnp.sqrt(jnp.sum(c * c, axis=-1, keepdims=True) / (d - 1))
    normed = gamma * c / (std + EPS) + beta
    y = jnp.einsum("btd,de->bte", normed, w,
                   preferred_element_type=jnp.float32) + b
    return (xf + y).astype(x.dtype)


if __name__ == "__main__":
    # Shapes consistent with the module's documented [30, 10, 512] forward (size = 512).
    B, T, D = 30, 10, 512

    key = jax.random.PRNGKey(0)
    kx, kw = jax.random.split(key)

    x = jax.random.normal(kx, (B, T, D), dtype=jnp.float32)

    # LayerNorm params (ones/zeros init) and a deterministic sublayer Linear (zero bias).
    gamma = jnp.ones((D,), dtype=jnp.float32)
    beta = jnp.zeros((D,), dtype=jnp.float32)
    w = (jax.random.normal(kw, (D, D), dtype=jnp.float32) / jnp.sqrt(D)).astype(jnp.float32)
    b = jnp.zeros((D,), dtype=jnp.float32)

    # Fold once at "init" (hoisted out of the per-call hot path).
    w_folded, b_folded = fold_sublayer_params(gamma, beta, w, b)
    w_folded, b_folded = jax.block_until_ready((w_folded, b_folded))

    out = sublayer_connection(x, w_folded, b_folded)
    jax.block_until_ready(out)

    ref = _reference(x, gamma, beta, w, b)
    assert out.shape == (B, T, D)
    # bf16 MXU operands (f32 accumulation) are the intended accuracy trade => relaxed tolerance.
    assert jnp.allclose(out, ref, atol=3e-2, rtol=3e-2), "mismatch vs JAX reference"

    print("KERNEL_OK")
</pallas_src>

<mosaic_0001>
module attributes {stable_mosaic.version = 11 : i64} {
  func.func @_sublayer_connection_kernel(%arg0: i32, %arg1: memref<152x512xf32, #tpu.memory_space<vmem>>, %arg2: memref<512x512xbf16, #tpu.memory_space<vmem>>, %arg3: memref<1x512xf32, #tpu.memory_space<vmem>>, %arg4: memref<152x512xf32, #tpu.memory_space<vmem>>) attributes {dimension_semantics = [#tpu.dimension_semantics<parallel>], iteration_bounds = array<i64: 2>, scalar_prefetch = 0 : i64, scratch_operands = 0 : i64, tpu.core_type = #tpu.core_type<tc>, window_params = [{transform_indices = @transform_0, window_bounds = array<i64: 152, 512>}, {pipeline_mode = #tpu.pipeline_mode<synchronous>, transform_indices = @transform_1, window_bounds = array<i64: 512, 512>}, {pipeline_mode = #tpu.pipeline_mode<synchronous>, transform_indices = @transform_2, window_bounds = array<i64: 1, 512>}, {transform_indices = @transform_3, window_bounds = array<i64: 152, 512>}]} {
    %c0 = arith.constant 0 : index
    %c0_0 = arith.constant 0 : index
    %0 = vector.load %arg1[%c0, %c0_0] : memref<152x512xf32, #tpu.memory_space<vmem>>, vector<152x512xf32>
    %cst = arith.constant dense<0.000000e+00> : vector<152xf32>
    %1 = vector.multi_reduction <add>, %0, %cst [1] : vector<152x512xf32> to vector<152xf32>
    %2 = vector.shape_cast %1 : vector<152xf32> to vector<152x1xf32>
    %3 = arith.mulf %0, %0 : vector<152x512xf32>
    %cst_1 = arith.constant dense<0.000000e+00> : vector<152xf32>
    %4 = vector.multi_reduction <add>, %3, %cst_1 [1] : vector<152x512xf32> to vector<152xf32>
    %5 = vector.shape_cast %4 : vector<152xf32> to vector<152x1xf32>
    %cst_2 = arith.constant 0.001953125 : f32
    %6 = vector.broadcast %cst_2 : f32 to vector<152x1xf32>
    %7 = arith.mulf %2, %6 : vector<152x1xf32>
    %8 = arith.mulf %2, %7 : vector<152x1xf32>
    %9 = arith.subf %5, %8 : vector<152x1xf32>
    %cst_3 = arith.constant 0.00195694715 : f32
    %10 = vector.broadcast %cst_3 : f32 to vector<152x1xf32>
    %11 = arith.mulf %9, %10 : vector<152x1xf32>
    %cst_4 = arith.constant 0.000000e+00 : f32
    %12 = vector.broadcast %cst_4 : f32 to vector<152x1xf32>
    %13 = arith.maximumf %11, %12 : vector<152x1xf32>
    %14 = math.sqrt %13 : vector<152x1xf32>
    %cst_5 = arith.constant 9.99999997E-7 : f32
    %15 = vector.broadcast %cst_5 : f32 to vector<152x1xf32>
    %16 = arith.addf %14, %15 : vector<152x1xf32>
    %17 = tpu.reciprocal %16 : vector<152x1xf32> -> vector<152x1xf32>
    %18 = vector.broadcast %7 : vector<152x1xf32> to vector<152x512xf32>
    %19 = arith.subf %0, %18 : vector<152x512xf32>
    %20 = vector.broadcast %17 : vector<152x1xf32> to vector<152x512xf32>
    %21 = arith.mulf %19, %20 : vector<152x512xf32>
    %22 = arith.truncf %21 : vector<152x512xf32> to vector<152x512xbf16>
    %c0_6 = arith.constant 0 : index
    %c0_7 = arith.constant 0 : index
    %23 = vector.load %arg2[%c0_6, %c0_7] : memref<512x512xbf16, #tpu.memory_space<vmem>>, vector<512x512xbf16>
    %cst_8 = arith.constant dense<0.000000e+00> : vector<152x512xf32>
    %24 = tpu.matmul %22, %23, %cst_8 {dimension_numbers = #tpu.dot_dimension_numbers<[1], [0], [0], [1], [0, 0, 1, 1], [], []>} : vector<152x512xbf16>, vector<512x512xbf16>, vector<152x512xf32> -> vector<152x512xf32>
    %c0_9 = arith.constant 0 : index
    %c0_10 = arith.constant 0 : index
    %25 = vector.load %arg3[%c0_9, %c0_10] : memref<1x512xf32, #tpu.memory_space<vmem>>, vector<1x512xf32>
    %26 = vector.broadcast %25 : vector<1x512xf32> to vector<152x512xf32>
    %27 = arith.addf %24, %26 : vector<152x512xf32>
    %28 = arith.addf %0, %27 : vector<152x512xf32>
    %c0_11 = arith.constant 0 : index
    %c0_12 = arith.constant 0 : index
    %29 = vector.load %arg4[%c0_11, %c0_12] : memref<152x512xf32, #tpu.memory_space<vmem>>, vector<152x512xf32>
    tpu.vector_store %arg4[%c0_11, %c0_12], %28 {strides = array<i32>} : memref<152x512xf32, #tpu.memory_space<vmem>>, vector<152x512xf32>,
    return
  }
  func.func @transform_0(%arg0: i32) -> (i32, i32) {
    %c0_i32 = arith.constant 0 : i32
    %c0_i32_0 = arith.constant 0 : i32
    return %arg0, %c0_i32 : i32, i32
  }
  func.func @transform_1(%arg0: i32) -> (i32, i32) {
    %c0_i32 = arith.constant 0 : i32
    %c0_i32_0 = arith.constant 0 : i32
    %c0_i32_1 = arith.constant 0 : i32
    return %c0_i32, %c0_i32_0 : i32, i32
  }
  func.func @transform_2(%arg0: i32) -> (i32, i32) {
    %c0_i32 = arith.constant 0 : i32
    %c0_i32_0 = arith.constant 0 : i32
    %c0_i32_1 = arith.constant 0 : i32
    return %c0_i32, %c0_i32_0 : i32, i32
  }
  func.func @transform_3(%arg0: i32) -> (i32, i32) {
    %c0_i32 = arith.constant 0 : i32
    %c0_i32_0 = arith.constant 0 : i32
    return %arg0, %c0_i32 : i32, i32
  }
}

</mosaic_0001>

<llo_original>
// kernel: tpu_custom_call.1
$region0: #{tpu_custom_call.1}
  #allocation0 [shape = 'u32[]', space=smem, size = 0x4, offset = 0x4, fixed_abs, tag = 'smem constant byte address 0x4 - core index']
  #allocation1 [shape = 'u32[144,128]{1,0:T(1,128)}', space=vmem, size = 0x12000, scoped, tag = 'internal scratch']
  %s0 = inlined_call_operand.hbm [shape: f32[300,512], index: 0, kind: input, shape index: {}]
  %s1 = inlined_call_operand.hbm [shape: bf16[512,512], index: 1, kind: input, shape index: {}]
  %s2 = inlined_call_operand.hbm [shape: f32[1,512], index: 2, kind: input, shape index: {}]
  %s3 = inlined_call_operand.hbm [shape: f32[300,512], index: 3, kind: output, shape index: {}]
  %s4 = sld [smem:[#allocation0]]
  $region57: #{tpu_custom_call.1} parent=0
    _
  %s6 = ssub.s32 1, %s4
  %s7 = scalar_select 0, %s6, %s4
  $region1: #{tpu_custom_call.1} parent=0
    #allocation2 [shape = 'u8[622592]{0}', space=vmem, size = 0x98000, scoped, tag = 'input window, operand 0']
    #allocation3 [shape = 's32[2]{0}', space=sflag, size = 0x8, scoped, tag = 'scoped memory for tpu_custom_call.1']
    #allocation4 [shape = 's32[2]{0}', space=sflag, size = 0x8, scoped, tag = 'scoped memory for tpu_custom_call.1']
    #allocation5 [shape = 'u8[524288]{0}', space=vmem, size = 0x80000, scoped, tag = 'input window, operand 1, single buffered']
    #allocation6 [shape = 's32[1]{0}', space=sflag, size = 0x4, scoped, tag = 'scoped memory for tpu_custom_call.1']
    #allocation7 [shape = 'u8[2048]{0}', space=vmem, size = 0x800, scoped, tag = 'input window, operand 2, single buffered']
    #allocation8 [shape = 'u8[622592]{0}', space=vmem, size = 0x98000, scoped, tag = 'output window, operand 0']
    %8 = vsyncpa [#allocation3], 0
    %s9 = scalar_lea.sflag [#allocation3], 1
    %10 = vsyncpa %s9, 0
    %11 = vsyncpa [#allocation6], 0
    %12 = vsyncpa [#allocation4], 0
    %s13 = scalar_lea.sflag [#allocation4], 1
    %14 = vsyncpa %s13, 0
    loop: start=0, step=1, limit=4
    $region2: #{tpu_custom_call.1} parent=1 // loop_pre_header
      _
    $region3: #{tpu_custom_call.1} parent=1 // loop_header
      %s16 = sphi 0, %s20
      %p17 = scmp.ge.s32.totalorder %s16, 4
      %s26 = sphi 0, %s28
      %s29 = sphi 0, %s26
      %s30 = sphi 0, %s29
      %s46 = sphi 0, %s30
      %s50 = sphi 0, %s50
      %s52 = sphi 0, %s50
      %s53 = sphi 0, %s52
      %s67 = sphi 0, %s53
      %s71 = sphi 0, %s71
      %s73 = sphi 0, %s71
      %s74 = sphi 0, %s73
      %s88 = sphi 0, %s74
      %s94 = sphi 0, %s96
      %s97 = sphi 0, %s94
      %s98 = sphi 0, %s97
      %s114 = sphi 0, %s98
    $region4: #{tpu_custom_call.1} parent=1 // loop_header_branch
      %19 = sbr.rel (%p17) target = $region8
    $region5: #{tpu_custom_call.1} parent=1 // loop_body
      %s21 = ssub.s32 %s16, 1
      %s22 = ssub.s32 %s16, 2
      %s23 = sadd.s32 %s16, 1
      %s24 = ssub.s32 %s16, %s23
      %p25 = scmp.eq.s32.totalorder %s24, 0
      %s27 = sadd.s32 %s26, 1
      %s28 = scalar_select %p25, %s26, %s27
      %p31 = pneg %p25
      %p32 = scmp.eq.s32.totalorder %s16, 1
      %p33 = por %p31, %p32
      %p34 = scmp.ne.s32.totalorder %s26, %s29
      %p35 = scmp.eq.s32.totalorder %s16, 0
      %p36 = por %p34, %p35
      %p37 = scmp.ne.s32.totalorder %s26, %s29
      %p38 = scmp.eq.s32.totalorder %s21, 1
      %p39 = por %p37, %p38
      %p40 = scmp.ne.s32.totalorder %s29, %s30
      %p41 = scmp.eq.s32.totalorder %s21, 0
      %p42 = por %p40, %p41
      %p43 = scmp.ne.s32.totalorder %s29, %s30
      %p44 = scmp.eq.s32.totalorder %s22, 1
      %p45 = por %p43, %p44
      %p47 = scmp.ne.s32.totalorder %s30, %s46
      %p48 = scmp.eq.s32.totalorder %s22, 0
      %p49 = por %p47, %p48
      %s51 = sadd.s32 %s50, 1
      %p54 = scmp.eq.s32.totalorder %s16, 1
      %p55 = scmp.ne.s32.totalorder %s50, %s52
      %p56 = scmp.eq.s32.totalorder %s16, 0
      %p57 = por %p55, %p56
      %p58 = scmp.ne.s32.totalorder %s50, %s52
      %p59 = scmp.eq.s32.totalorder %s21, 1
      %p60 = por %p58, %p59
      %p61 = scmp.ne.s32.totalorder %s52, %s53
      %p62 = scmp.eq.s32.totalorder %s21, 0
      %p63 = por %p61, %p62
      %p64 = scmp.ne.s32.totalorder %s52, %s53
      %p65 = scmp.eq.s32.totalorder %s22, 1
      %p66 = por %p64, %p65
      %p68 = scmp.ne.s32.totalorder %s53, %s67
      %p69 = scmp.eq.s32.totalorder %s22, 0
      %p70 = por %p68, %p69
      %s72 = sadd.s32 %s71, 1
      %p75 = scmp.eq.s32.totalorder %s16, 1
      %p76 = scmp.ne.s32.totalorder %s71, %s73
      %p77 = scmp.eq.s32.totalorder %s16, 0
      %p78 = por %p76, %p77
      %p79 = scmp.ne.s32.totalorder %s71, %s73
      %p80 = scmp.eq.s32.totalorder %s21, 1
      %p81 = por %p79, %p80
      %p82 = scmp.ne.s32.totalorder %s73, %s74
      %p83 = scmp.eq.s32.totalorder %s21, 0
      %p84 = por %p82, %p83
      %p85 = scmp.ne.s32.totalorder %s73, %s74
      %p86 = scmp.eq.s32.totalorder %s22, 1
      %p87 = por %p85, %p86
      %p89 = scmp.ne.s32.totalorder %s74, %s88
      %p90 = scmp.eq.s32.totalorder %s22, 0
      %p91 = por %p89, %p90
      %s92 = ssub.s32 %s16, %s23
      %p93 = scmp.eq.s32.totalorder %s92, 0
      %s95 = sadd.s32 %s94, 1
      %s96 = scalar_select %p93, %s94, %s95
      %p99 = pneg %p93
      %p100 = scmp.eq.s32.totalorder %s16, 1
      %p101 = por %p99, %p100
      %p102 = scmp.ne.s32.totalorder %s94, %s97
      %p103 = scmp.eq.s32.totalorder %s16, 0
      %p104 = por %p102, %p103
      %p105 = scmp.ne.s32.totalorder %s94, %s97
      %p106 = scmp.eq.s32.totalorder %s21, 1
      %p107 = por %p105, %p106
      %p108 = scmp.ne.s32.totalorder %s97, %s98
      %p109 = scmp.eq.s32.totalorder %s21, 0
      %p110 = por %p108, %p109
      %p111 = scmp.ne.s32.totalorder %s97, %s98
      %p112 = scmp.eq.s32.totalorder %s22, 1
      %p113 = por %p111, %p112
      %p115 = scmp.ne.s32.totalorder %s98, %s114
      %p116 = scmp.eq.s32.totalorder %s22, 0
      %p117 = por %p115, %p116
      %p118 = scmp.le.s32.totalorder 1, %s16
      %p119 = scmp.lt.s32.totalorder %s16, 3
      %p120 = pnand %p118, %p119
      %p121 = pneg %p120
      // Predicated region
      $region9: #{tpu_custom_call.1} parent=5 // pred_check
        _
      $region10: #{tpu_custom_call.1} parent=5 // pred_check_branch
        %123 = sbr.rel (%p120) target = $region12
      $region11: #{tpu_custom_call.1} parent=5 // pred_region
        %s124 = ssub.s32 %s16, 1
        // Predicated region
        $region13: #{tpu_custom_call.1} parent=11 // pred_check
          %p125 = pneg %p63
        $region14: #{tpu_custom_call.1} parent=11 // pred_check_branch
          %127 = sbr.rel (%p125) target = $region16
        $region15: #{tpu_custom_call.1} parent=11 // pred_region
          %s129 = ssub.s32 16384, 16384
          %130 = vsyncadd [#allocation6], %s129
          %s131 = sshll.u32 [#allocation5], 4
          %s132 = int_to_ptr.vmem [resolvable:$true] %s131
          %137 = dma.hbm_to_vmem [thread:$0]  %s1, 16384, %s132, [#allocation6], 256, 256, 16
        $region16: #{tpu_custom_call.1} parent=11 // pred_fallthru
          _
        // Predicated region
        $region17: #{tpu_custom_call.1} parent=11 // pred_check
          %p138 = pneg %p84
        $region18: #{tpu_custom_call.1} parent=11 // pred_check_branch
          %140 = sbr.rel (%p138) target = $region20
        $region19: #{tpu_custom_call.1} parent=11 // pred_region
          %s142 = ssub.s32 64, 64
          %143 = vsyncadd [#allocation6], %s142
          %s145 = sshll.u32 [#allocation7], 4
          %s146 = int_to_ptr.vmem [resolvable:$true] %s145
          %148 = dma.hbm_to_vmem [thread:$0]  %s2, 64, %s146, [#allocation6]
        $region20: #{tpu_custom_call.1} parent=11 // pred_fallthru
          _
      $region12: #{tpu_custom_call.1} parent=5 // pred_fallthru
        _
      %p149 = scmp.lt.s32.totalorder %s16, 2
      // Predicated region
      $region21: #{tpu_custom_call.1} parent=5 // pred_check
        %p150 = pneg %p149
      $region22: #{tpu_custom_call.1} parent=5 // pred_check_branch
        %152 = sbr.rel (%p150) target = $region24
      $region23: #{tpu_custom_call.1} parent=5 // pred_region
        // Predicated region
        $region25: #{tpu_custom_call.1} parent=23 // pred_check
          %p153 = pneg %p36
        $region26: #{tpu_custom_call.1} parent=23 // pred_check_branch
          %155 = sbr.rel (%p153) target = $region28
        $region27: #{tpu_custom_call.1} parent=23 // pred_region
          %s156 = sand.u32 %s26, 1
          %s157 = scalar_lea.sflag [#allocation3], %s156
          %s158 = sand.u32 %s26, 1
          %s159 = smul.addr %s158, 608
          %s160 = scalar_lea.vmem [#allocation2], %s159
          %s161 = smul.u32 19, %s16
          %s163 = ssub.s32 9728, 9728
          %164 = vsyncadd %s157, %s163
          %s165 = smul.addr %s161, 4
          %s166 = smul.addr %s165, 128
          %s167 = scalar_lea.hbm %s0, %s166
          %s168 = sshll.u32 %s160, 4
          %s169 = int_to_ptr.vmem [resolvable:$true] %s168
          %174 = dma.hbm_to_vmem [thread:$0]  %s167, 9728, %s169, %s157, 512, 512, 32
        $region28: #{tpu_custom_call.1} parent=23 // pred_fallthru
          _
      $region24: #{tpu_custom_call.1} parent=5 // pred_fallthru
        _
      %p175 = scmp.le.s32.totalorder 1, %s16
      %p176 = scmp.lt.s32.totalorder %s16, 3
      %p177 = pnand %p175, %p176
      %p178 = pneg %p177
      // Predicated region
      $region29: #{tpu_custom_call.1} parent=5 // pred_check
        _
      $region30: #{tpu_custom_call.1} parent=5 // pred_check_branch
        %180 = sbr.rel (%p177) target = $region32
      $region31: #{tpu_custom_call.1} parent=5 // pred_region
        %s181 = ssub.s32 %s16, 1
        %s182 = sand.u32 %s29, 1
        %s183 = scalar_lea.sflag [#allocation3], %s182
        %s184 = sand.u32 %s29, 1
        %s185 = smul.addr %s184, 608
        %s186 = scalar_lea.vmem [#allocation2], %s185
        // Predicated region
        $region33: #{tpu_custom_call.1} parent=31 // pred_check
          %p187 = pneg %p42
        $region34: #{tpu_custom_call.1} parent=31 // pred_check_branch
          %189 = sbr.rel (%p187) target = $region36
        $region35: #{tpu_custom_call.1} parent=31 // pred_region
          %190 = dma.done %s183, 9728
        $region36: #{tpu_custom_call.1} parent=31 // pred_fallthru
          _
        // Predicated region
        $region37: #{tpu_custom_call.1} parent=31 // pred_check
          %p191 = pneg %p63
        $region38: #{tpu_custom_call.1} parent=31 // pred_check_branch
          %193 = sbr.rel (%p191) target = $region40
        $region39: #{tpu_custom_call.1} parent=31 // pred_region
          %194 = dma.done [#allocation6], 16384
        $region40: #{tpu_custom_call.1} parent=31 // pred_fallthru
          _
        // Predicated region
        $region41: #{tpu_custom_call.1} parent=31 // pred_check
          %p195 = pneg %p84
        $region42: #{tpu_custom_call.1} parent=31 // pred_check_branch
          %197 = sbr.rel (%p195) target = $region44
        $region43: #{tpu_custom_call.1} parent=31 // pred_region
          %198 = dma.done [#allocation6], 64
        $region44: #{tpu_custom_call.1} parent=31 // pred_fallthru
          _
        %s199 = sand.u32 %s29, 1
        %s200 = scalar_lea.sflag [#allocation3], %s199
        %s201 = sand.u32 %s29, 1
        %s202 = smul.addr %s201, 608
        %s203 = scalar_lea.vmem [#allocation2], %s202
        %p204 = pneg %p42
        %p205 = pneg %p39
        %p206 = pneg %p63
        %p207 = pneg %p60
        %p208 = pneg %p84
        %p209 = pneg %p81
        %p210 = pneg %p110
        %p211 = pneg %p107
        %s212 = sand.u32 %s97, 1
        %s213 = scalar_lea.sflag [#allocation4], %s212
        %s214 = sand.u32 %s97, 1
        %s215 = smul.addr %s214, 608
        %s216 = scalar_lea.vmem [#allocation8], %s215
        %s217 = smul.u32 19, %s21
        %s218 = smul.u32 19, %s21
        %v219 = vld [vmem:[%s186] sm:$0xff]
        %v220 = vld [vmem:[%s186 + $0x8] sm:$0xff]
        %v221 = vld [vmem:[%s186 + $0x10] sm:$0xff]
        %v222 = vld [vmem:[%s186 + $0x18] sm:$0xff]
        %v223 = vld [vmem:[%s186 + $0x20] sm:$0xff]
        %v224 = vld [vmem:[%s186 + $0x28] sm:$0xff]
        %v225 = vld [vmem:[%s186 + $0x30] sm:$0xff]
        %v226 = vld [vmem:[%s186 + $0x38] sm:$0xff]
        %v227 = vld [vmem:[%s186 + $0x40] sm:$0xff]
        %v228 = vld [vmem:[%s186 + $0x48] sm:$0xff]
        %v229 = vld [vmem:[%s186 + $0x50] sm:$0xff]
        %v230 = vld [vmem:[%s186 + $0x58] sm:$0xff]
        %v231 = vld [vmem:[%s186 + $0x60] sm:$0xff]
        %v232 = vld [vmem:[%s186 + $0x68] sm:$0xff]
        %v233 = vld [vmem:[%s186 + $0x70] sm:$0xff]
        %v234 = vld [vmem:[%s186 + $0x78] sm:$0xff]
        %v235 = vld [vmem:[%s186 + $0x80] sm:$0xff]
        %v236 = vld [vmem:[%s186 + $0x88] sm:$0xff]
        %v237 = vld [vmem:[%s186 + $0x90] sm:$0xff]
        %v238 = vld [vmem:[%s186 + $0x98] sm:$0xff]
        %v239 = vld [vmem:[%s186 + $0xa0] sm:$0xff]
        %v240 = vld [vmem:[%s186 + $0xa8] sm:$0xff]
        %v241 = vld [vmem:[%s186 + $0xb0] sm:$0xff]
        %v242 = vld [vmem:[%s186 + $0xb8] sm:$0xff]
        %v243 = vld [vmem:[%s186 + $0xc0] sm:$0xff]
        %v244 = vld [vmem:[%s186 + $0xc8] sm:$0xff]
        %v245 = vld [vmem:[%s186 + $0xd0] sm:$0xff]
        %v246 = vld [vmem:[%s186 + $0xd8] sm:$0xff]
        %v247 = vld [vmem:[%s186 + $0xe0] sm:$0xff]
        %v248 = vld [vmem:[%s186 + $0xe8] sm:$0xff]
        %v249 = vld [vmem:[%s186 + $0xf0] sm:$0xff]
        %v250 = vld [vmem:[%s186 + $0xf8] sm:$0xff]
        %v251 = vld [vmem:[%s186 + $0x100] sm:$0xff]
        %v252 = vld [vmem:[%s186 + $0x108] sm:$0xff]
        %v253 = vld [vmem:[%s186 + $0x110] sm:$0xff]
        %v254 = vld [vmem:[%s186 + $0x118] sm:$0xff]
        %v255 = vld [vmem:[%s186 + $0x120] sm:$0xff]
        %v256 = vld [vmem:[%s186 + $0x128] sm:$0xff]
        %v257 = vld [vmem:[%s186 + $0x130] sm:$0xff]
        %v258 = vld [vmem:[%s186 + $0x138] sm:$0xff]
        %v259 = vld [vmem:[%s186 + $0x140] sm:$0xff]
        %v260 = vld [vmem:[%s186 + $0x148] sm:$0xff]
        %v261 = vld [vmem:[%s186 + $0x150] sm:$0xff]
        %v262 = vld [vmem:[%s186 + $0x158] sm:$0xff]
        %v263 = vld [vmem:[%s186 + $0x160] sm:$0xff]
        %v264 = vld [vmem:[%s186 + $0x168] sm:$0xff]
        %v265 = vld [vmem:[%s186 + $0x170] sm:$0xff]
        %v266 = vld [vmem:[%s186 + $0x178] sm:$0xff]
        %v267 = vld [vmem:[%s186 + $0x180] sm:$0xff]
        %v268 = vld [vmem:[%s186 + $0x188] sm:$0xff]
        %v269 = vld [vmem:[%s186 + $0x190] sm:$0xff]
        %v270 = vld [vmem:[%s186 + $0x198] sm:$0xff]
        %v271 = vld [vmem:[%s186 + $0x1a0] sm:$0xff]
        %v272 = vld [vmem:[%s186 + $0x1a8] sm:$0xff]
        %v273 = vld [vmem:[%s186 + $0x1b0] sm:$0xff]
        %v274 = vld [vmem:[%s186 + $0x1b8] sm:$0xff]
        %v275 = vld [vmem:[%s186 + $0x1c0] sm:$0xff]
        %v276 = vld [vmem:[%s186 + $0x1c8] sm:$0xff]
        %v277 = vld [vmem:[%s186 + $0x1d0] sm:$0xff]
        %v278 = vld [vmem:[%s186 + $0x1d8] sm:$0xff]
        %v279 = vld [vmem:[%s186 + $0x1e0] sm:$0xff]
        %v280 = vld [vmem:[%s186 + $0x1e8] sm:$0xff]
        %v281 = vld [vmem:[%s186 + $0x1f0] sm:$0xff]
        %v282 = vld [vmem:[%s186 + $0x1f8] sm:$0xff]
        %v283 = vld [vmem:[%s186 + $0x200] sm:$0xff]
        %v284 = vld [vmem:[%s186 + $0x208] sm:$0xff]
        %v285 = vld [vmem:[%s186 + $0x210] sm:$0xff]
        %v286 = vld [vmem:[%s186 + $0x218] sm:$0xff]
        %v287 = vld [vmem:[%s186 + $0x220] sm:$0xff]
        %v288 = vld [vmem:[%s186 + $0x228] sm:$0xff]
        %v289 = vld [vmem:[%s186 + $0x230] sm:$0xff]
        %v290 = vld [vmem:[%s186 + $0x238] sm:$0xff]
        %v291 = vld [vmem:[%s186 + $0x240] sm:$0xff]
        %v292 = vld [vmem:[%s186 + $0x248] sm:$0xff]
        %v293 = vld [vmem:[%s186 + $0x250] sm:$0xff]
        %v294 = vld [vmem:[%s186 + $0x258] sm:$0xff]
        %v295 = vadd.f32 %v219, %v220
        %v296 = vadd.f32 %v295, %v221
        %v297 = vadd.f32 %v296, %v222
        %298 = vadd.xlane.f32.xlu0 %v297
        %v299 = vpop.xlane.xlu0 %298
        %v300 = vadd.f32 %v223, %v224
        %v301 = vadd.f32 %v300, %v225
        %v302 = vadd.f32 %v301, %v226
        %303 = vadd.xlane.f32.xlu0 %v302
        %v304 = vpop.xlane.xlu0 %303
        %v305 = vadd.f32 %v227, %v228
        %v306 = vadd.f32 %v305, %v229
        %v307 = vadd.f32 %v306, %v230
        %308 = vadd.xlane.f32.xlu0 %v307
        %v309 = vpop.xlane.xlu0 %308
        %v310 = vadd.f32 %v231, %v232
        %v311 = vadd.f32 %v310, %v233
        %v312 = vadd.f32 %v311, %v234
        %313 = vadd.xlane.f32.xlu0 %v312
        %v314 = vpop.xlane.xlu0 %313
        %v315 = vadd.f32 %v235, %v236
        %v316 = vadd.f32 %v315, %v237
        %v317 = vadd.f32 %v316, %v238
        %318 = vadd.xlane.f32.xlu0 %v317
        %v319 = vpop.xlane.xlu0 %318
        %v320 = vadd.f32 %v239, %v240
        %v321 = vadd.f32 %v320, %v241
        %v322 = vadd.f32 %v321, %v242
        %323 = vadd.xlane.f32.xlu0 %v322
        %v324 = vpop.xlane.xlu0 %323
        %v325 = vadd.f32 %v243, %v244
        %v326 = vadd.f32 %v325, %v245
        %v327 = vadd.f32 %v326, %v246
        %328 = vadd.xlane.f32.xlu0 %v327
        %v329 = vpop.xlane.xlu0 %328
        %v330 = vadd.f32 %v247, %v248
        %v331 = vadd.f32 %v330, %v249
        %v332 = vadd.f32 %v331, %v250
        %333 = vadd.xlane.f32.xlu0 %v332
        %v334 = vpop.xlane.xlu0 %333
        %v335 = vadd.f32 %v251, %v252
        %v336 = vadd.f32 %v335, %v253
        %v337 = vadd.f32 %v336, %v254
        %338 = vadd.xlane.f32.xlu0 %v337
        %v339 = vpop.xlane.xlu0 %338
        %v340 = vadd.f32 %v255, %v256
        %v341 = vadd.f32 %v340, %v257
        %v342 = vadd.f32 %v341, %v258
        %343 = vadd.xlane.f32.xlu0 %v342
        %v344 = vpop.xlane.xlu0 %343
        %v345 = vadd.f32 %v259, %v260
        %v346 = vadd.f32 %v345, %v261
        %v347 = vadd.f32 %v346, %v262
        %348 = vadd.xlane.f32.xlu0 %v347
        %v349 = vpop.xlane.xlu0 %348
        %v350 = vadd.f32 %v263, %v264
        %v351 = vadd.f32 %v350, %v265
        %v352 = vadd.f32 %v351, %v266
        %353 = vadd.xlane.f32.xlu0 %v352
        %v354 = vpop.xlane.xlu0 %353
        %v355 = vadd.f32 %v267, %v268
        %v356 = vadd.f32 %v355, %v269
        %v357 = vadd.f32 %v356, %v270
        %358 = vadd.xlane.f32.xlu0 %v357
        %v359 = vpop.xlane.xlu0 %358
        %v360 = vadd.f32 %v271, %v272
        %v361 = vadd.f32 %v360, %v273
        %v362 = vadd.f32 %v361, %v274
        %363 = vadd.xlane.f32.xlu0 %v362
        %v364 = vpop.xlane.xlu0 %363
        %v365 = vadd.f32 %v275, %v276
        %v366 = vadd.f32 %v365, %v277
        %v367 = vadd.f32 %v366, %v278
        %368 = vadd.xlane.f32.xlu0 %v367
        %v369 = vpop.xlane.xlu0 %368
        %v370 = vadd.f32 %v279, %v280
        %v371 = vadd.f32 %v370, %v281
        %v372 = vadd.f32 %v371, %v282
        %373 = vadd.xlane.f32.xlu0 %v372
        %v374 = vpop.xlane.xlu0 %373
        %v375 = vadd.f32 %v283, %v284
        %v376 = vadd.f32 %v375, %v285
        %v377 = vadd.f32 %v376, %v286
        %378 = vadd.xlane.f32.xlu0 %v377
        %v379 = vpop.xlane.xlu0 %378
        %v380 = vadd.f32 %v287, %v288
        %v381 = vadd.f32 %v380, %v289
        %v382 = vadd.f32 %v381, %v290
        %383 = vadd.xlane.f32.xlu0 %v382
        %v384 = vpop.xlane.xlu0 %383
        %v385 = vadd.f32 %v291, %v292
        %v386 = vadd.f32 %v385, %v293
        %v387 = vadd.f32 %v386, %v294
        %388 = vadd.xlane.f32.xlu0 %v387
        %v389 = vpop.xlane.xlu0 %388
        %v390 = vmul.f32 %v219, %v219
        %v391 = vmul.f32 %v220, %v220
        %v392 = vmul.f32 %v221, %v221
        %v393 = vmul.f32 %v222, %v222
        %v394 = vmul.f32 %v223, %v223
        %v395 = vmul.f32 %v224, %v224
        %v396 = vmul.f32 %v225, %v225
        %v397 = vmul.f32 %v226, %v226
        %v398 = vmul.f32 %v227, %v227
        %v399 = vmul.f32 %v228, %v228
        %v400 = vmul.f32 %v229, %v229
        %v401 = vmul.f32 %v230, %v230
        %v402 = vmul.f32 %v231, %v231
        %v403 = vmul.f32 %v232, %v232
        %v404 = vmul.f32 %v233, %v233
        %v405 = vmul.f32 %v234, %v234
        %v406 = vmul.f32 %v235, %v235
        %v407 = vmul.f32 %v236, %v236
        %v408 = vmul.f32 %v237, %v237
        %v409 = vmul.f32 %v238, %v238
        %v410 = vmul.f32 %v239, %v239
        %v411 = vmul.f32 %v240, %v240
        %v412 = vmul.f32 %v241, %v241
        %v413 = vmul.f32 %v242, %v242
        %v414 = vmul.f32 %v243, %v243
        %v415 = vmul.f32 %v244, %v244
        %v416 = vmul.f32 %v245, %v245
        %v417 = vmul.f32 %v246, %v246
        %v418 = vmul.f32 %v247, %v247
        %v419 = vmul.f32 %v248, %v248
        %v420 = vmul.f32 %v249, %v249
        %v421 = vmul.f32 %v250, %v250
        %v422 = vmul.f32 %v251, %v251
        %v423 = vmul.f32 %v252, %v252
        %v424 = vmul.f32 %v253, %v253
        %v425 = vmul.f32 %v254, %v254
        %v426 = vmul.f32 %v255, %v255
        %v427 = vmul.f32 %v256, %v256
        %v428 = vmul.f32 %v257, %v257
        %v429 = vmul.f32 %v258, %v258
        %v430 = vmul.f32 %v259, %v259
        %v431 = vmul.f32 %v260, %v260
        %v432 = vmul.f32 %v261, %v261
        %v433 = vmul.f32 %v262, %v262
        %v434 = vmul.f32 %v263, %v263
        %v435 = vmul.f32 %v264, %v264
        %v436 = vmul.f32 %v265, %v265
        %v437 = vmul.f32 %v266, %v266
        %v438 = vmul.f32 %v267, %v267
        %v439 = vmul.f32 %v268, %v268
        %v440 = vmul.f32 %v269, %v269
        %v441 = vmul.f32 %v270, %v270
        %v442 = vmul.f32 %v271, %v271
        %v443 = vmul.f32 %v272, %v272
        %v444 = vmul.f32 %v273, %v273
        %v445 = vmul.f32 %v274, %v274
        %v446 = vmul.f32 %v275, %v275
        %v447 = vmul.f32 %v276, %v276
        %v448 = vmul.f32 %v277, %v277
        %v449 = vmul.f32 %v278, %v278
        %v450 = vmul.f32 %v279, %v279
        %v451 = vmul.f32 %v280, %v280
        %v452 = vmul.f32 %v281, %v281
        %v453 = vmul.f32 %v282, %v282
        %v454 = vmul.f32 %v283, %v283
        %v455 = vmul.f32 %v284, %v284
        %v456 = vmul.f32 %v285, %v285
        %v457 = vmul.f32 %v286, %v286
        %v458 = vmul.f32 %v287, %v287
        %v459 = vmul.f32 %v288, %v288
        %v460 = vmul.f32 %v289, %v289
        %v461 = vmul.f32 %v290, %v290
        %v462 = vmul.f32 %v291, %v291
        %v463 = vmul.f32 %v292, %v292
        %v464 = vmul.f32 %v293, %v293
        %v465 = vmul.f32 %v294, %v294
        %v466 = vadd.f32 %v390, %v391
        %v467 = vadd.f32 %v466, %v392
        %v468 = vadd.f32 %v467, %v393
        %469 = vadd.xlane.f32.xlu0 %v468
        %v470 = vpop.xlane.xlu0 %469
        %v471 = vadd.f32 %v394, %v395
        %v472 = vadd.f32 %v471, %v396
        %v473 = vadd.f32 %v472, %v397
        %474 = vadd.xlane.f32.xlu0 %v473
        %v475 = vpop.xlane.xlu0 %474
        %v476 = vadd.f32 %v398, %v399
        %v477 = vadd.f32 %v476, %v400
        %v478 = vadd.f32 %v477, %v401
        %479 = vadd.xlane.f32.xlu0 %v478
        %v480 = vpop.xlane.xlu0 %479
        %v481 = vadd.f32 %v402, %v403
        %v482 = vadd.f32 %v481, %v404
        %v483 = vadd.f32 %v482, %v405
        %484 = vadd.xlane.f32.xlu0 %v483
        %v485 = vpop.xlane.xlu0 %484
        %v486 = vadd.f32 %v406, %v407
        %v487 = vadd.f32 %v486, %v408
        %v488 = vadd.f32 %v487, %v409
        %489 = vadd.xlane.f32.xlu0 %v488
        %v490 = vpop.xlane.xlu0 %489
        %v491 = vadd.f32 %v410, %v411
        %v492 = vadd.f32 %v491, %v412
        %v493 = vadd.f32 %v492, %v413
        %494 = vadd.xlane.f32.xlu0 %v493
        %v495 = vpop.xlane.xlu0 %494
        %v496 = vadd.f32 %v414, %v415
        %v497 = vadd.f32 %v496, %v416
        %v498 = vadd.f32 %v497, %v417
        %499 = vadd.xlane.f32.xlu0 %v498
        %v500 = vpop.xlane.xlu0 %499
        %v501 = vadd.f32 %v418, %v419
        %v502 = vadd.f32 %v501, %v420
        %v503 = vadd.f32 %v502, %v421
        %504 = vadd.xlane.f32.xlu0 %v503
        %v505 = vpop.xlane.xlu0 %504
        %v506 = vadd.f32 %v422, %v423
        %v507 = vadd.f32 %v506, %v424
        %v508 = vadd.f32 %v507, %v425
        %509 = vadd.xlane.f32.xlu0 %v508
        %v510 = vpop.xlane.xlu0 %509
        %v511 = vadd.f32 %v426, %v427
        %v512 = vadd.f32 %v511, %v428
        %v513 = vadd.f32 %v512, %v429
        %514 = vadd.xlane.f32.xlu0 %v513
        %v515 = vpop.xlane.xlu0 %514
        %v516 = vadd.f32 %v430, %v431
        %v517 = vadd.f32 %v516, %v432
        %v518 = vadd.f32 %v517, %v433
        %519 = vadd.xlane.f32.xlu0 %v518
        %v520 = vpop.xlane.xlu0 %519
        %v521 = vadd.f32 %v434, %v435
        %v522 = vadd.f32 %v521, %v436
        %v523 = vadd.f32 %v522, %v437
        %524 = vadd.xlane.f32.xlu0 %v523
        %v525 = vpop.xlane.xlu0 %524
        %v526 = vadd.f32 %v438, %v439
        %v527 = vadd.f32 %v526, %v440
        %v528 = vadd.f32 %v527, %v441
        %529 = vadd.xlane.f32.xlu0 %v528
        %v530 = vpop.xlane.xlu0 %529
        %v531 = vadd.f32 %v442, %v443
        %v532 = vadd.f32 %v531, %v444
        %v533 = vadd.f32 %v532, %v445
        %534 = vadd.xlane.f32.xlu0 %v533
        %v535 = vpop.xlane.xlu0 %534
        %v536 = vadd.f32 %v446, %v447
        %v537 = vadd.f32 %v536, %v448
        %v538 = vadd.f32 %v537, %v449
        %539 = vadd.xlane.f32.xlu0 %v538
        %v540 = vpop.xlane.xlu0 %539
        %v541 = vadd.f32 %v450, %v451
        %v542 = vadd.f32 %v541, %v452
        %v543 = vadd.f32 %v542, %v453
        %544 = vadd.xlane.f32.xlu0 %v543
        %v545 = vpop.xlane.xlu0 %544
        %v546 = vadd.f32 %v454, %v455
        %v547 = vadd.f32 %v546, %v456
        %v548 = vadd.f32 %v547, %v457
        %549 = vadd.xlane.f32.xlu0 %v548
        %v550 = vpop.xlane.xlu0 %549
        %v551 = vadd.f32 %v458, %v459
        %v552 = vadd.f32 %v551, %v460
        %v553 = vadd.f32 %v552, %v461
        %554 = vadd.xlane.f32.xlu0 %v553
        %v555 = vpop.xlane.xlu0 %554
        %v556 = vadd.f32 %v462, %v463
        %v557 = vadd.f32 %v556, %v464
        %v558 = vadd.f32 %v557, %v465
        %559 = vadd.xlane.f32.xlu0 %v558
        %v560 = vpop.xlane.xlu0 %559
        %v561 = vmul.f32 %v299, 0.001953125
        %v562 = vmul.f32 %v304, 0.001953125
        %v563 = vmul.f32 %v309, 0.001953125
        %v564 = vmul.f32 %v314, 0.001953125
        %v565 = vmul.f32 %v319, 0.001953125
        %v566 = vmul.f32 %v324, 0.001953125
        %v567 = vmul.f32 %v329, 0.001953125
        %v568 = vmul.f32 %v334, 0.001953125
        %v569 = vmul.f32 %v339, 0.001953125
        %v570 = vmul.f32 %v344, 0.001953125
        %v571 = vmul.f32 %v349, 0.001953125
        %v572 = vmul.f32 %v354, 0.001953125
        %v573 = vmul.f32 %v359, 0.001953125
        %v574 = vmul.f32 %v364, 0.001953125
        %v575 = vmul.f32 %v369, 0.001953125
        %v576 = vmul.f32 %v374, 0.001953125
        %v577 = vmul.f32 %v379, 0.001953125
        %v578 = vmul.f32 %v384, 0.001953125
        %v579 = vmul.f32 %v389, 0.001953125
        %v580 = vmul.f32 %v299, %v561
        %v581 = vmul.f32 %v304, %v562
        %v582 = vmul.f32 %v309, %v563
        %v583 = vmul.f32 %v314, %v564
        %v584 = vmul.f32 %v319, %v565
        %v585 = vmul.f32 %v324, %v566
        %v586 = vmul.f32 %v329, %v567
        %v587 = vmul.f32 %v334, %v568
        %v588 = vmul.f32 %v339, %v569
        %v589 = vmul.f32 %v344, %v570
        %v590 = vmul.f32 %v349, %v571
        %v591 = vmul.f32 %v354, %v572
        %v592 = vmul.f32 %v359, %v573
        %v593 = vmul.f32 %v364, %v574
        %v594 = vmul.f32 %v369, %v575
        %v595 = vmul.f32 %v374, %v576
        %v596 = vmul.f32 %v379, %v577
        %v597 = vmul.f32 %v384, %v578
        %v598 = vmul.f32 %v389, %v579
        %v599 = vsub.f32 %v470, %v580
        %v600 = vsub.f32 %v475, %v581
        %v601 = vsub.f32 %v480, %v582
        %v602 = vsub.f32 %v485, %v583
        %v603 = vsub.f32 %v490, %v584
        %v604 = vsub.f32 %v495, %v585
        %v605 = vsub.f32 %v500, %v586
        %v606 = vsub.f32 %v505, %v587
        %v607 = vsub.f32 %v510, %v588
        %v608 = vsub.f32 %v515, %v589
        %v609 = vsub.f32 %v520, %v590
        %v610 = vsub.f32 %v525, %v591
        %v611 = vsub.f32 %v530, %v592
        %v612 = vsub.f32 %v535, %v593
        %v613 = vsub.f32 %v540, %v594
        %v614 = vsub.f32 %v545, %v595
        %v615 = vsub.f32 %v550, %v596
        %v616 = vsub.f32 %v555, %v597
        %v617 = vsub.f32 %v560, %v598
        %v618 = vmul.f32 %v599, 0.0019569471
        %v619 = vmul.f32 %v600, 0.0019569471
        %v620 = vmul.f32 %v601, 0.0019569471
        %v621 = vmul.f32 %v602, 0.0019569471
        %v622 = vmul.f32 %v603, 0.0019569471
        %v623 = vmul.f32 %v604, 0.0019569471
        %v624 = vmul.f32 %v605, 0.0019569471
        %v625 = vmul.f32 %v606, 0.0019569471
        %v626 = vmul.f32 %v607, 0.0019569471
        %v627 = vmul.f32 %v608, 0.0019569471
        %v628 = vmul.f32 %v609, 0.0019569471
        %v629 = vmul.f32 %v610, 0.0019569471
        %v630 = vmul.f32 %v611, 0.0019569471
        %v631 = vmul.f32 %v612, 0.0019569471
        %v632 = vmul.f32 %v613, 0.0019569471
        %v633 = vmul.f32 %v614, 0.0019569471
        %v634 = vmul.f32 %v615, 0.0019569471
        %v635 = vmul.f32 %v616, 0.0019569471
        %v636 = vmul.f32 %v617, 0.0019569471
        %v637 = vmax.f32 %v618, 0.0
        %v638 = vmax.f32 %v619, 0.0
        %v639 = vmax.f32 %v620, 0.0
        %v640 = vmax.f32 %v621, 0.0
        %v641 = vmax.f32 %v622, 0.0
        %v642 = vmax.f32 %v623, 0.0
        %v643 = vmax.f32 %v624, 0.0
        %v644 = vmax.f32 %v625, 0.0
        %v645 = vmax.f32 %v626, 0.0
        %v646 = vmax.f32 %v627, 0.0
        %v647 = vmax.f32 %v628, 0.0
        %v648 = vmax.f32 %v629, 0.0
        %v649 = vmax.f32 %v630, 0.0
        %v650 = vmax.f32 %v631, 0.0
        %v651 = vmax.f32 %v632, 0.0
        %v652 = vmax.f32 %v633, 0.0
        %v653 = vmax.f32 %v634, 0.0
        %v654 = vmax.f32 %v635, 0.0
        %v655 = vmax.f32 %v636, 0.0
        %v656 = vrsqrt.pop %v637
        %v657 = vmul.f32 %v637, %v656
        %vm658 = vcmp.eq.f32.partialorder %v637, inf
        %v659 = vsel %vm658, %v637, %v657
        %vm660 = vcmp.eq.f32.partialorder %v637, 0.0
        %v661 = vand.u32 %v637, 2147483648
        %v662 = vsel %vm660, %v661, %v659
        %v663 = vrsqrt.pop %v638
        %v664 = vmul.f32 %v638, %v663
        %vm665 = vcmp.eq.f32.partialorder %v638, inf
        %v666 = vsel %vm665, %v638, %v664
        %vm667 = vcmp.eq.f32.partialorder %v638, 0.0
        %v668 = vand.u32 %v638, 2147483648
        %v669 = vsel %vm667, %v668, %v666
        %v670 = vrsqrt.pop %v639
        %v671 = vmul.f32 %v639, %v670
        %vm672 = vcmp.eq.f32.partialorder %v639, inf
        %v673 = vsel %vm672, %v639, %v671
        %vm674 = vcmp.eq.f32.partialorder %v639, 0.0
        %v675 = vand.u32 %v639, 2147483648
        %v676 = vsel %vm674, %v675, %v673
        %v677 = vrsqrt.pop %v640
        %v678 = vmul.f32 %v640, %v677
        %vm679 = vcmp.eq.f32.partialorder %v640, inf
        %v680 = vsel %vm679, %v640, %v678
        %vm681 = vcmp.eq.f32.partialorder %v640, 0.0
        %v682 = vand.u32 %v640, 2147483648
        %v683 = vsel %vm681, %v682, %v680
        %v684 = vrsqrt.pop %v641
        %v685 = vmul.f32 %v641, %v684
        %vm686 = vcmp.eq.f32.partialorder %v641, inf
        %v687 = vsel %vm686, %v641, %v685
        %vm688 = vcmp.eq.f32.partialorder %v641, 0.0
        %v689 = vand.u32 %v641, 2147483648
        %v690 = vsel %vm688, %v689, %v687
        %v691 = vrsqrt.pop %v642
        %v692 = vmul.f32 %v642, %v691
        %vm693 = vcmp.eq.f32.partialorder %v642, inf
        %v694 = vsel %vm693, %v642, %v692
        %vm695 = vcmp.eq.f32.partialorder %v642, 0.0
        %v696 = vand.u32 %v642, 2147483648
        %v697 = vsel %vm695, %v696, %v694
        %v698 = vrsqrt.pop %v643
        %v699 = vmul.f32 %v643, %v698
        %vm700 = vcmp.eq.f32.partialorder %v643, inf
        %v701 = vsel %vm700, %v643, %v699
        %vm702 = vcmp.eq.f32.partialorder %v643, 0.0
        %v703 = vand.u32 %v643, 2147483648
        %v704 = vsel %vm702, %v703, %v701
        %v705 = vrsqrt.pop %v644
        %v706 = vmul.f32 %v644, %v705
        %vm707 = vcmp.eq.f32.partialorder %v644, inf
        %v708 = vsel %vm707, %v644, %v706
        %vm709 = vcmp.eq.f32.partialorder %v644, 0.0
        %v710 = vand.u32 %v644, 2147483648
        %v711 = vsel %vm709, %v710, %v708
        %v712 = vrsqrt.pop %v645
        %v713 = vmul.f32 %v645, %v712
        %vm714 = vcmp.eq.f32.partialorder %v645, inf
        %v715 = vsel %vm714, %v645, %v713
        %vm716 = vcmp.eq.f32.partialorder %v645, 0.0
        %v717 = vand.u32 %v645, 2147483648
        %v718 = vsel %vm716, %v717, %v715
        %v719 = vrsqrt.pop %v646
        %v720 = vmul.f32 %v646, %v719
        %vm721 = vcmp.eq.f32.partialorder %v646, inf
        %v722 = vsel %vm721, %v646, %v720
        %vm723 = vcmp.eq.f32.partialorder %v646, 0.0
        %v724 = vand.u32 %v646, 2147483648
        %v725 = vsel %vm723, %v724, %v722
        %v726 = vrsqrt.pop %v647
        %v727 = vmul.f32 %v647, %v726
        %vm728 = vcmp.eq.f32.partialorder %v647, inf
        %v729 = vsel %vm728, %v647, %v727
        %vm730 = vcmp.eq.f32.partialorder %v647, 0.0
        %v731 = vand.u32 %v647, 2147483648
        %v732 = vsel %vm730, %v731, %v729
        %v733 = vrsqrt.pop %v648
        %v734 = vmul.f32 %v648, %v733
        %vm735 = vcmp.eq.f32.partialorder %v648, inf
        %v736 = vsel %vm735, %v648, %v734
        %vm737 = vcmp.eq.f32.partialorder %v648, 0.0
        %v738 = vand.u32 %v648, 2147483648
        %v739 = vsel %vm737, %v738, %v736
        %v740 = vrsqrt.pop %v649
        %v741 = vmul.f32 %v649, %v740
        %vm742 = vcmp.eq.f32.partialorder %v649, inf
        %v743 = vsel %vm742, %v649, %v741
        %vm744 = vcmp.eq.f32.partialorder %v649, 0.0
        %v745 = vand.u32 %v649, 2147483648
        %v746 = vsel %vm744, %v745, %v743
        %v747 = vrsqrt.pop %v650
        %v748 = vmul.f32 %v650, %v747
        %vm749 = vcmp.eq.f32.partialorder %v650, inf
        %v750 = vsel %vm749, %v650, %v748
        %vm751 = vcmp.eq.f32.partialorder %v650, 0.0
        %v752 = vand.u32 %v650, 2147483648
        %v753 = vsel %vm751, %v752, %v750
        %v754 = vrsqrt.pop %v651
        %v755 = vmul.f32 %v651, %v754
        %vm756 = vcmp.eq.f32.partialorder %v651, inf
        %v757 = vsel %vm756, %v651, %v755
        %vm758 = vcmp.eq.f32.partialorder %v651, 0.0
        %v759 = vand.u32 %v651, 2147483648
        %v760 = vsel %vm758, %v759, %v757
        %v761 = vrsqrt.pop %v652
        %v762 = vmul.f32 %v652, %v761
        %vm763 = vcmp.eq.f32.partialorder %v652, inf
        %v764 = vsel %vm763, %v652, %v762
        %vm765 = vcmp.eq.f32.partialorder %v652, 0.0
        %v766 = vand.u32 %v652, 2147483648
        %v767 = vsel %vm765, %v766, %v764
        %v768 = vrsqrt.pop %v653
        %v769 = vmul.f32 %v653, %v768
        %vm770 = vcmp.eq.f32.partialorder %v653, inf
        %v771 = vsel %vm770, %v653, %v769
        %vm772 = vcmp.eq.f32.partialorder %v653, 0.0
        %v773 = vand.u32 %v653, 2147483648
        %v774 = vsel %vm772, %v773, %v771
        %v775 = vrsqrt.pop %v654
        %v776 = vmul.f32 %v654, %v775
        %vm777 = vcmp.eq.f32.partialorder %v654, inf
        %v778 = vsel %vm777, %v654, %v776
        %vm779 = vcmp.eq.f32.partialorder %v654, 0.0
        %v780 = vand.u32 %v654, 2147483648
        %v781 = vsel %vm779, %v780, %v778
        %v782 = vrsqrt.pop %v655
        %v783 = vmul.f32 %v655, %v782
        %vm784 = vcmp.eq.f32.partialorder %v655, inf
        %v785 = vsel %vm784, %v655, %v783
        %vm786 = vcmp.eq.f32.partialorder %v655, 0.0
        %v787 = vand.u32 %v655, 2147483648
        %v788 = vsel %vm786, %v787, %v785
        %v789 = vadd.f32 %v662, 1e-06
        %v790 = vadd.f32 %v669, 1e-06
        %v791 = vadd.f32 %v676, 1e-06
        %v792 = vadd.f32 %v683, 1e-06
        %v793 = vadd.f32 %v690, 1e-06
        %v794 = vadd.f32 %v697, 1e-06
        %v795 = vadd.f32 %v704, 1e-06
        %v796 = vadd.f32 %v711, 1e-06
        %v797 = vadd.f32 %v718, 1e-06
        %v798 = vadd.f32 %v725, 1e-06
        %v799 = vadd.f32 %v732, 1e-06
        %v800 = vadd.f32 %v739, 1e-06
        %v801 = vadd.f32 %v746, 1e-06
        %v802 = vadd.f32 %v753, 1e-06
        %v803 = vadd.f32 %v760, 1e-06
        %v804 = vadd.f32 %v767, 1e-06
        %v805 = vadd.f32 %v774, 1e-06
        %v806 = vadd.f32 %v781, 1e-06
        %v807 = vadd.f32 %v788, 1e-06
        %v808 = vrcp.pop %v789
        %v809 = vrcp.pop %v790
        %v810 = vrcp.pop %v791
        %v811 = vrcp.pop %v792
        %v812 = vrcp.pop %v793
        %v813 = vrcp.pop %v794
        %v814 = vrcp.pop %v795
        %v815 = vrcp.pop %v796
        %v816 = vrcp.pop %v797
        %v817 = vrcp.pop %v798
        %v818 = vrcp.pop %v799
        %v819 = vrcp.pop %v800
        %v820 = vrcp.pop %v801
        %v821 = vrcp.pop %v802
        %v822 = vrcp.pop %v803
        %v823 = vrcp.pop %v804
        %v824 = vrcp.pop %v805
        %v825 = vrcp.pop %v806
        %v826 = vrcp.pop %v807
        %v827 = vsub.f32 %v219, %v561
        %v828 = vsub.f32 %v220, %v561
        %v829 = vsub.f32 %v221, %v561
        %v830 = vsub.f32 %v222, %v561
        %v831 = vsub.f32 %v223, %v562
        %v832 = vsub.f32 %v224, %v562
        %v833 = vsub.f32 %v225, %v562
        %v834 = vsub.f32 %v226, %v562
        %v835 = vsub.f32 %v227, %v563
        %v836 = vsub.f32 %v228, %v563
        %v837 = vsub.f32 %v229, %v563
        %v838 = vsub.f32 %v230, %v563
        %v839 = vsub.f32 %v231, %v564
        %v840 = vsub.f32 %v232, %v564
        %v841 = vsub.f32 %v233, %v564
        %v842 = vsub.f32 %v234, %v564
        %v843 = vsub.f32 %v235, %v565
        %v844 = vsub.f32 %v236, %v565
        %v845 = vsub.f32 %v237, %v565
        %v846 = vsub.f32 %v238, %v565
        %v847 = vsub.f32 %v239, %v566
        %v848 = vsub.f32 %v240, %v566
        %v849 = vsub.f32 %v241, %v566
        %v850 = vsub.f32 %v242, %v566
        %v851 = vsub.f32 %v243, %v567
        %v852 = vsub.f32 %v244, %v567
        %v853 = vsub.f32 %v245, %v567
        %v854 = vsub.f32 %v246, %v567
        %v855 = vsub.f32 %v247, %v568
        %v856 = vsub.f32 %v248, %v568
        %v857 = vsub.f32 %v249, %v568
        %v858 = vsub.f32 %v250, %v568
        %v859 = vsub.f32 %v251, %v569
        %v860 = vsub.f32 %v252, %v569
        %v861 = vsub.f32 %v253, %v569
        %v862 = vsub.f32 %v254, %v569
        %v863 = vsub.f32 %v255, %v570
        %v864 = vsub.f32 %v256, %v570
        %v865 = vsub.f32 %v257, %v570
        %v866 = vsub.f32 %v258, %v570
        %v867 = vsub.f32 %v259, %v571
        %v868 = vsub.f32 %v260, %v571
        %v869 = vsub.f32 %v261, %v571
        %v870 = vsub.f32 %v262, %v571
        %v871 = vsub.f32 %v263, %v572
        %v872 = vsub.f32 %v264, %v572
        %v873 = vsub.f32 %v265, %v572
        %v874 = vsub.f32 %v266, %v572
        %v875 = vsub.f32 %v267, %v573
        %v876 = vsub.f32 %v268, %v573
        %v877 = vsub.f32 %v269, %v573
        %v878 = vsub.f32 %v270, %v573
        %v879 = vsub.f32 %v271, %v574
        %v880 = vsub.f32 %v272, %v574
        %v881 = vsub.f32 %v273, %v574
        %v882 = vsub.f32 %v274, %v574
        %v883 = vsub.f32 %v275, %v575
        %v884 = vsub.f32 %v276, %v575
        %v885 = vsub.f32 %v277, %v575
        %v886 = vsub.f32 %v278, %v575
        %v887 = vsub.f32 %v279, %v576
        %v888 = vsub.f32 %v280, %v576
        %v889 = vsub.f32 %v281, %v576
        %v890 = vsub.f32 %v282, %v576
        %v891 = vsub.f32 %v283, %v577
        %v892 = vsub.f32 %v284, %v577
        %v893 = vsub.f32 %v285, %v577
        %v894 = vsub.f32 %v286, %v577
        %v895 = vsub.f32 %v287, %v578
        %v896 = vsub.f32 %v288, %v578
        %v897 = vsub.f32 %v289, %v578
        %v898 = vsub.f32 %v290, %v578
        %v899 = vsub.f32 %v291, %v579
        %v900 = vsub.f32 %v292, %v579
        %v901 = vsub.f32 %v293, %v579
        %v902 = vsub.f32 %v294, %v579
        %v903 = vmul.f32 %v827, %v808
        %v904 = vmul.f32 %v828, %v808
        %v905 = vmul.f32 %v829, %v808
        %v906 = vmul.f32 %v830, %v808
        %v907 = vmul.f32 %v831, %v809
        %v908 = vmul.f32 %v832, %v809
        %v909 = vmul.f32 %v833, %v809
        %v910 = vmul.f32 %v834, %v809
        %v911 = vmul.f32 %v835, %v810
        %v912 = vmul.f32 %v836, %v810
        %v913 = vmul.f32 %v837, %v810
        %v914 = vmul.f32 %v838, %v810
        %v915 = vmul.f32 %v839, %v811
        %v916 = vmul.f32 %v840, %v811
        %v917 = vmul.f32 %v841, %v811
        %v918 = vmul.f32 %v842, %v811
        %v919 = vmul.f32 %v843, %v812
        %v920 = vmul.f32 %v844, %v812
        %v921 = vmul.f32 %v845, %v812
        %v922 = vmul.f32 %v846, %v812
        %v923 = vmul.f32 %v847, %v813
        %v924 = vmul.f32 %v848, %v813
        %v925 = vmul.f32 %v849, %v813
        %v926 = vmul.f32 %v850, %v813
        %v927 = vmul.f32 %v851, %v814
        %v928 = vmul.f32 %v852, %v814
        %v929 = vmul.f32 %v853, %v814
        %v930 = vmul.f32 %v854, %v814
        %v931 = vmul.f32 %v855, %v815
        %v932 = vmul.f32 %v856, %v815
        %v933 = vmul.f32 %v857, %v815
        %v934 = vmul.f32 %v858, %v815
        %v935 = vmul.f32 %v859, %v816
        %v936 = vmul.f32 %v860, %v816
        %v937 = vmul.f32 %v861, %v816
        %v938 = vmul.f32 %v862, %v816
        %v939 = vmul.f32 %v863, %v817
        %v940 = vmul.f32 %v864, %v817
        %v941 = vmul.f32 %v865, %v817
        %v942 = vmul.f32 %v866, %v817
        %v943 = vmul.f32 %v867, %v818
        %v944 = vmul.f32 %v868, %v818
        %v945 = vmul.f32 %v869, %v818
        %v946 = vmul.f32 %v870, %v818
        %v947 = vmul.f32 %v871, %v819
        %v948 = vmul.f32 %v872, %v819
        %v949 = vmul.f32 %v873, %v819
        %v950 = vmul.f32 %v874, %v819
        %v951 = vmul.f32 %v875, %v820
        %v952 = vmul.f32 %v876, %v820
        %v953 = vmul.f32 %v877, %v820
        %v954 = vmul.f32 %v878, %v820
        %v955 = vmul.f32 %v879, %v821
        %v956 = vmul.f32 %v880, %v821
        %v957 = vmul.f32 %v881, %v821
        %v958 = vmul.f32 %v882, %v821
        %v959 = vmul.f32 %v883, %v822
        %v960 = vmul.f32 %v884, %v822
        %v961 = vmul.f32 %v885, %v822
        %v962 = vmul.f32 %v886, %v822
        %v963 = vmul.f32 %v887, %v823
        %v964 = vmul.f32 %v888, %v823
        %v965 = vmul.f32 %v889, %v823
        %v966 = vmul.f32 %v890, %v823
        %v967 = vmul.f32 %v891, %v824
        %v968 = vmul.f32 %v892, %v824
        %v969 = vmul.f32 %v893, %v824
        %v970 = vmul.f32 %v894, %v824
        %v971 = vmul.f32 %v895, %v825
        %v972 = vmul.f32 %v896, %v825
        %v973 = vmul.f32 %v897, %v825
        %v974 = vmul.f32 %v898, %v825
        %v975 = vmul.f32 %v899, %v826
        %v976 = vmul.f32 %v900, %v826
        %v977 = vmul.f32 %v901, %v826
        %v978 = vmul.f32 %v902, %v826
        %v979 = vpack.c.bf16 %v907, %v903
        %v980 = vpack.c.bf16 %v908, %v904
        %v981 = vpack.c.bf16 %v909, %v905
        %v982 = vpack.c.bf16 %v910, %v906
        %v983 = vpack.c.bf16 %v915, %v911
        %v984 = vpack.c.bf16 %v916, %v912
        %v985 = vpack.c.bf16 %v917, %v913
        %v986 = vpack.c.bf16 %v918, %v914
        %v987 = vpack.c.bf16 %v923, %v919
        %v988 = vpack.c.bf16 %v924, %v920
        %v989 = vpack.c.bf16 %v925, %v921
        %v990 = vpack.c.bf16 %v926, %v922
        %v991 = vpack.c.bf16 %v931, %v927
        %v992 = vpack.c.bf16 %v932, %v928
        %v993 = vpack.c.bf16 %v933, %v929
        %v994 = vpack.c.bf16 %v934, %v930
        %v995 = vpack.c.bf16 %v939, %v935
        %v996 = vpack.c.bf16 %v940, %v936
        %v997 = vpack.c.bf16 %v941, %v937
        %v998 = vpack.c.bf16 %v942, %v938
        %v999 = vpack.c.bf16 %v947, %v943
        %v1000 = vpack.c.bf16 %v948, %v944
        %v1001 = vpack.c.bf16 %v949, %v945
        %v1002 = vpack.c.bf16 %v950, %v946
        %v1003 = vpack.c.bf16 %v955, %v951
        %v1004 = vpack.c.bf16 %v956, %v952
        %v1005 = vpack.c.bf16 %v957, %v953
        %v1006 = vpack.c.bf16 %v958, %v954
        %v1007 = vpack.c.bf16 %v963, %v959
        %v1008 = vpack.c.bf16 %v964, %v960
        %v1009 = vpack.c.bf16 %v965, %v961
        %v1010 = vpack.c.bf16 %v966, %v962
        %v1011 = vpack.c.bf16 %v971, %v967
        %v1012 = vpack.c.bf16 %v972, %v968
        %v1013 = vpack.c.bf16 %v973, %v969
        %v1014 = vpack.c.bf16 %v974, %v970
        %v1015 = vpack.c.bf16 %v975, %v975
        %v1016 = vpack.c.bf16 %v976, %v976
        %v1017 = vpack.c.bf16 %v977, %v977
        %v1018 = vpack.c.bf16 %v978, %v978
        %v1019 = vld [vmem:[#allocation5] sm:$0xff]
        %v1020 = vld [vmem:[#allocation5 + $0x8] sm:$0xff]
        %v1021 = vld [vmem:[#allocation5 + $0x10] sm:$0xff]
        %v1022 = vld [vmem:[#allocation5 + $0x18] sm:$0xff]
        %v1023 = vld [vmem:[#allocation5 + $0x20] sm:$0xff]
        %v1024 = vld [vmem:[#allocation5 + $0x28] sm:$0xff]
        %v1025 = vld [vmem:[#allocation5 + $0x30] sm:$0xff]
        %v1026 = vld [vmem:[#allocation5 + $0x38] sm:$0xff]
        %v1027 = vld [vmem:[#allocation5 + $0x40] sm:$0xff]
        %v1028 = vld [vmem:[#allocation5 + $0x48] sm:$0xff]
        %v1029 = vld [vmem:[#allocation5 + $0x50] sm:$0xff]
        %v1030 = vld [vmem:[#allocation5 + $0x58] sm:$0xff]
        %v1031 = vld [vmem:[#allocation5 + $0x60] sm:$0xff]
        %v1032 = vld [vmem:[#allocation5 + $0x68] sm:$0xff]
        %v1033 = vld [vmem:[#allocation5 + $0x70] sm:$0xff]
        %v1034 = vld [vmem:[#allocation5 + $0x78] sm:$0xff]
        %v1035 = vld [vmem:[#allocation5 + $0x80] sm:$0xff]
        %v1036 = vld [vmem:[#allocation5 + $0x88] sm:$0xff]
        %v1037 = vld [vmem:[#allocation5 + $0x90] sm:$0xff]
        %v1038 = vld [vmem:[#allocation5 + $0x98] sm:$0xff]
        %v1039 = vld [vmem:[#allocation5 + $0xa0] sm:$0xff]
        %v1040 = vld [vmem:[#allocation5 + $0xa8] sm:$0xff]
        %v1041 = vld [vmem:[#allocation5 + $0xb0] sm:$0xff]
        %v1042 = vld [vmem:[#allocation5 + $0xb8] sm:$0xff]
        %v1043 = vld [vmem:[#allocation5 + $0xc0] sm:$0xff]
        %v1044 = vld [vmem:[#allocation5 + $0xc8] sm:$0xff]
        %v1045 = vld [vmem:[#allocation5 + $0xd0] sm:$0xff]
        %v1046 = vld [vmem:[#allocation5 + $0xd8] sm:$0xff]
        %v1047 = vld [vmem:[#allocation5 + $0xe0] sm:$0xff]
        %v1048 = vld [vmem:[#allocation5 + $0xe8] sm:$0xff]
        %v1049 = vld [vmem:[#allocation5 + $0xf0] sm:$0xff]
        %v1050 = vld [vmem:[#allocation5 + $0xf8] sm:$0xff]
        %v1051 = vld [vmem:[#allocation5 + $0x100] sm:$0xff]
        %v1052 = vld [vmem:[#allocation5 + $0x108] sm:$0xff]
        %v1053 = vld [vmem:[#allocation5 + $0x110] sm:$0xff]
        %v1054 = vld [vmem:[#allocation5 + $0x118] sm:$0xff]
        %v1055 = vld [vmem:[#allocation5 + $0x120] sm:$0xff]
        %v1056 = vld [vmem:[#allocation5 + $0x128] sm:$0xff]
        %v1057 = vld [vmem:[#allocation5 + $0x130] sm:$0xff]
        %v1058 = vld [vmem:[#allocation5 + $0x138] sm:$0xff]
        %v1059 = vld [vmem:[#allocation5 + $0x140] sm:$0xff]
        %v1060 = vld [vmem:[#allocation5 + $0x148] sm:$0xff]
        %v1061 = vld [vmem:[#allocation5 + $0x150] sm:$0xff]
        %v1062 = vld [vmem:[#allocation5 + $0x158] sm:$0xff]
        %v1063 = vld [vmem:[#allocation5 + $0x160] sm:$0xff]
        %v1064 = vld [vmem:[#allocation5 + $0x168] sm:$0xff]
        %v1065 = vld [vmem:[#allocation5 + $0x170] sm:$0xff]
        %v1066 = vld [vmem:[#allocation5 + $0x178] sm:$0xff]
        %v1067 = vld [vmem:[#allocation5 + $0x180] sm:$0xff]
        %v1068 = vld [vmem:[#allocation5 + $0x188] sm:$0xff]
        %v1069 = vld [vmem:[#allocation5 + $0x190] sm:$0xff]
        %v1070 = vld [vmem:[#allocation5 + $0x198] sm:$0xff]
        %v1071 = vld [vmem:[#allocation5 + $0x1a0] sm:$0xff]
        %v1072 = vld [vmem:[#allocation5 + $0x1a8] sm:$0xff]
        %v1073 = vld [vmem:[#allocation5 + $0x1b0] sm:$0xff]
        %v1074 = vld [vmem:[#allocation5 + $0x1b8] sm:$0xff]
        %v1075 = vld [vmem:[#allocation5 + $0x1c0] sm:$0xff]
        %v1076 = vld [vmem:[#allocation5 + $0x1c8] sm:$0xff]
        %v1077 = vld [vmem:[#allocation5 + $0x1d0] sm:$0xff]
        %v1078 = vld [vmem:[#allocation5 + $0x1d8] sm:$0xff]
        %v1079 = vld [vmem:[#allocation5 + $0x1e0] sm:$0xff]
        %v1080 = vld [vmem:[#allocation5 + $0x1e8] sm:$0xff]
        %v1081 = vld [vmem:[#allocation5 + $0x1f0] sm:$0xff]
        %v1082 = vld [vmem:[#allocation5 + $0x1f8] sm:$0xff]
        %v1083 = vld [vmem:[#allocation5 + $0x200] sm:$0xff]
        %v1084 = vld [vmem:[#allocation5 + $0x208] sm:$0xff]
        %v1085 = vld [vmem:[#allocation5 + $0x210] sm:$0xff]
        %v1086 = vld [vmem:[#allocation5 + $0x218] sm:$0xff]
        %v1087 = vld [vmem:[#allocation5 + $0x220] sm:$0xff]
        %v1088 = vld [vmem:[#allocation5 + $0x228] sm:$0xff]
        %v1089 = vld [vmem:[#allocation5 + $0x230] sm:$0xff]
        %v1090 = vld [vmem:[#allocation5 + $0x238] sm:$0xff]
        %v1091 = vld [vmem:[#allocation5 + $0x240] sm:$0xff]
        %v1092 = vld [vmem:[#allocation5 + $0x248] sm:$0xff]
        %v1093 = vld [vmem:[#allocation5 + $0x250] sm:$0xff]
        %v1094 = vld [vmem:[#allocation5 + $0x258] sm:$0xff]
        %v1095 = vld [vmem:[#allocation5 + $0x260] sm:$0xff]
        %v1096 = vld [vmem:[#allocation5 + $0x268] sm:$0xff]
        %v1097 = vld [vmem:[#allocation5 + $0x270] sm:$0xff]
        %v1098 = vld [vmem:[#allocation5 + $0x278] sm:$0xff]
        %v1099 = vld [vmem:[#allocation5 + $0x280] sm:$0xff]
        %v1100 = vld [vmem:[#allocation5 + $0x288] sm:$0xff]
        %v1101 = vld [vmem:[#allocation5 + $0x290] sm:$0xff]
        %v1102 = vld [vmem:[#allocation5 + $0x298] sm:$0xff]
        %v1103 = vld [vmem:[#allocation5 + $0x2a0] sm:$0xff]
        %v1104 = vld [vmem:[#allocation5 + $0x2a8] sm:$0xff]
        %v1105 = vld [vmem:[#allocation5 + $0x2b0] sm:$0xff]
        %v1106 = vld [vmem:[#allocation5 + $0x2b8] sm:$0xff]
        %v1107 = vld [vmem:[#allocation5 + $0x2c0] sm:$0xff]
        %v1108 = vld [vmem:[#allocation5 + $0x2c8] sm:$0xff]
        %v1109 = vld [vmem:[#allocation5 + $0x2d0] sm:$0xff]
        %v1110 = vld [vmem:[#allocation5 + $0x2d8] sm:$0xff]
        %v1111 = vld [vmem:[#allocation5 + $0x2e0] sm:$0xff]
        %v1112 = vld [vmem:[#allocation5 + $0x2e8] sm:$0xff]
        %v1113 = vld [vmem:[#allocation5 + $0x2f0] sm:$0xff]
        %v1114 = vld [vmem:[#allocation5 + $0x2f8] sm:$0xff]
        %v1115 = vld [vmem:[#allocation5 + $0x300] sm:$0xff]
        %v1116 = vld [vmem:[#allocation5 + $0x308] sm:$0xff]
        %v1117 = vld [vmem:[#allocation5 + $0x310] sm:$0xff]
        %v1118 = vld [vmem:[#allocation5 + $0x318] sm:$0xff]
        %v1119 = vld [vmem:[#allocation5 + $0x320] sm:$0xff]
        %v1120 = vld [vmem:[#allocation5 + $0x328] sm:$0xff]
        %v1121 = vld [vmem:[#allocation5 + $0x330] sm:$0xff]
        %v1122 = vld [vmem:[#allocation5 + $0x338] sm:$0xff]
        %v1123 = vld [vmem:[#allocation5 + $0x340] sm:$0xff]
        %v1124 = vld [vmem:[#allocation5 + $0x348] sm:$0xff]
        %v1125 = vld [vmem:[#allocation5 + $0x350] sm:$0xff]
        %v1126 = vld [vmem:[#allocation5 + $0x358] sm:$0xff]
        %v1127 = vld [vmem:[#allocation5 + $0x360] sm:$0xff]
        %v1128 = vld [vmem:[#allocation5 + $0x368] sm:$0xff]
        %v1129 = vld [vmem:[#allocation5 + $0x370] sm:$0xff]
        %v1130 = vld [vmem:[#allocation5 + $0x378] sm:$0xff]
        %v1131 = vld [vmem:[#allocation5 + $0x380] sm:$0xff]
        %v1132 = vld [vmem:[#allocation5 + $0x388] sm:$0xff]
        %v1133 = vld [vmem:[#allocation5 + $0x390] sm:$0xff]
        %v1134 = vld [vmem:[#allocation5 + $0x398] sm:$0xff]
        %v1135 = vld [vmem:[#allocation5 + $0x3a0] sm:$0xff]
        %v1136 = vld [vmem:[#allocation5 + $0x3a8] sm:$0xff]
        %v1137 = vld [vmem:[#allocation5 + $0x3b0] sm:$0xff]
        %v1138 = vld [vmem:[#allocation5 + $0x3b8] sm:$0xff]
        %v1139 = vld [vmem:[#allocation5 + $0x3c0] sm:$0xff]
        %v1140 = vld [vmem:[#allocation5 + $0x3c8] sm:$0xff]
        %v1141 = vld [vmem:[#allocation5 + $0x3d0] sm:$0xff]
        %v1142 = vld [vmem:[#allocation5 + $0x3d8] sm:$0xff]
        %v1143 = vld [vmem:[#allocation5 + $0x3e0] sm:$0xff]
        %v1144 = vld [vmem:[#allocation5 + $0x3e8] sm:$0xff]
        %v1145 = vld [vmem:[#allocation5 + $0x3f0] sm:$0xff]
        %v1146 = vld [vmem:[#allocation5 + $0x3f8] sm:$0xff]
        %v1147 = vld [vmem:[#allocation7] sm:$0xf]
        %v1149 = vlaneseq
        %v1150 = vshrl.u32 %v1149, 7
        %v1151 = vsub.s32 0, %v1150
        %v1152 = vrot.slane %v1147, %v1151
        %v1153 = vlaneseq
        %v1154 = vshrl.u32 %v1153, 7
        %v1155 = vsub.s32 1, %v1154
        %v1156 = vrot.slane %v1147, %v1155
        %v1157 = vlaneseq
        %v1158 = vshrl.u32 %v1157, 7
        %v1159 = vsub.s32 2, %v1158
        %v1160 = vrot.slane %v1147, %v1159
        %v1161 = vlaneseq
        %v1162 = vshrl.u32 %v1161, 7
        %v1163 = vsub.s32 3, %v1162
        %v1164 = vrot.slane %v1147, %v1163
        %v1297 = vunpack.c.l.b16 %v1019
        %v1298 = vunpack.c.h.b16 %v1019
        %v1299 = vunpack.c.l.b16 %v1020
        %v1300 = vunpack.c.h.b16 %v1020
        %v1301 = vunpack.c.l.b16 %v1021
        %v1302 = vunpack.c.h.b16 %v1021
        %v1303 = vunpack.c.l.b16 %v1022
        %v1304 = vunpack.c.h.b16 %v1022
        %v1305 = vunpack.c.l.b16 %v1023
        %v1306 = vunpack.c.h.b16 %v1023
        %v1307 = vunpack.c.l.b16 %v1024
        %v1308 = vunpack.c.h.b16 %v1024
        %v1309 = vunpack.c.l.b16 %v1025
        %v1310 = vunpack.c.h.b16 %v1025
        %v1311 = vunpack.c.l.b16 %v1026
        %v1312 = vunpack.c.h.b16 %v1026
        %v1313 = vunpack.c.l.b16 %v1027
        %v1314 = vunpack.c.h.b16 %v1027
        %v1315 = vunpack.c.l.b16 %v1028
        %v1316 = vunpack.c.h.b16 %v1028
        %v1317 = vunpack.c.l.b16 %v1029
        %v1318 = vunpack.c.h.b16 %v1029
        %v1319 = vunpack.c.l.b16 %v1030
        %v1320 = vunpack.c.h.b16 %v1030
        %v1321 = vunpack.c.l.b16 %v1031
        %v1322 = vunpack.c.h.b16 %v1031
        %v1323 = vunpack.c.l.b16 %v1032
        %v1324 = vunpack.c.h.b16 %v1032
        %v1325 = vunpack.c.l.b16 %v1033
        %v1326 = vunpack.c.h.b16 %v1033
        %v1327 = vunpack.c.l.b16 %v1034
        %v1328 = vunpack.c.h.b16 %v1034
        %v1329 = vunpack.c.l.b16 %v1035
        %v1330 = vunpack.c.h.b16 %v1035
        %v1331 = vunpack.c.l.b16 %v1036
        %v1332 = vunpack.c.h.b16 %v1036
        %v1333 = vunpack.c.l.b16 %v1037
        %v1334 = vunpack.c.h.b16 %v1037
        %v1335 = vunpack.c.l.b16 %v1038
        %v1336 = vunpack.c.h.b16 %v1038
        %v1337 = vunpack.c.l.b16 %v1039
        %v1338 = vunpack.c.h.b16 %v1039
        %v1339 = vunpack.c.l.b16 %v1040
        %v1340 = vunpack.c.h.b16 %v1040
        %v1341 = vunpack.c.l.b16 %v1041
        %v1342 = vunpack.c.h.b16 %v1041
        %v1343 = vunpack.c.l.b16 %v1042
        %v1344 = vunpack.c.h.b16 %v1042
        %v1345 = vunpack.c.l.b16 %v1043
        %v1346 = vunpack.c.h.b16 %v1043
        %v1347 = vunpack.c.l.b16 %v1044
        %v1348 = vunpack.c.h.b16 %v1044
        %v1349 = vunpack.c.l.b16 %v1045
        %v1350 = vunpack.c.h.b16 %v1045
        %v1351 = vunpack.c.l.b16 %v1046
        %v1352 = vunpack.c.h.b16 %v1046
        %v1353 = vunpack.c.l.b16 %v1047
        %v1354 = vunpack.c.h.b16 %v1047
        %v1355 = vunpack.c.l.b16 %v1048
        %v1356 = vunpack.c.h.b16 %v1048
        %v1357 = vunpack.c.l.b16 %v1049
        %v1358 = vunpack.c.h.b16 %v1049
        %v1359 = vunpack.c.l.b16 %v1050
        %v1360 = vunpack.c.h.b16 %v1050
        %v1361 = vunpack.c.l.b16 %v1051
        %v1362 = vunpack.c.h.b16 %v1051
        %v1363 = vunpack.c.l.b16 %v1052
        %v1364 = vunpack.c.h.b16 %v1052
        %v1365 = vunpack.c.l.b16 %v1053
        %v1366 = vunpack.c.h.b16 %v1053
        %v1367 = vunpack.c.l.b16 %v1054
        %v1368 = vunpack.c.h.b16 %v1054
        %v1369 = vunpack.c.l.b16 %v1055
        %v1370 = vunpack.c.h.b16 %v1055
        %v1371 = vunpack.c.l.b16 %v1056
        %v1372 = vunpack.c.h.b16 %v1056
        %v1373 = vunpack.c.l.b16 %v1057
        %v1374 = vunpack.c.h.b16 %v1057
        %v1375 = vunpack.c.l.b16 %v1058
        %v1376 = vunpack.c.h.b16 %v1058
        %v1377 = vunpack.c.l.b16 %v1059
        %v1378 = vunpack.c.h.b16 %v1059
        %v1379 = vunpack.c.l.b16 %v1060
        %v1380 = vunpack.c.h.b16 %v1060
        %v1381 = vunpack.c.l.b16 %v1061
        %v1382 = vunpack.c.h.b16 %v1061
        %v1383 = vunpack.c.l.b16 %v1062
        %v1384 = vunpack.c.h.b16 %v1062
        %v1385 = vunpack.c.l.b16 %v1063
        %v1386 = vunpack.c.h.b16 %v1063
        %v1387 = vunpack.c.l.b16 %v1064
        %v1388 = vunpack.c.h.b16 %v1064
        %v1389 = vunpack.c.l.b16 %v1065
        %v1390 = vunpack.c.h.b16 %v1065
        %v1391 = vunpack.c.l.b16 %v1066
        %v1392 = vunpack.c.h.b16 %v1066
        %v1393 = vunpack.c.l.b16 %v1067
        %v1394 = vunpack.c.h.b16 %v1067
        %v1395 = vunpack.c.l.b16 %v1068
        %v1396 = vunpack.c.h.b16 %v1068
        %v1397 = vunpack.c.l.b16 %v1069
        %v1398 = vunpack.c.h.b16 %v1069
        %v1399 = vunpack.c.l.b16 %v1070
        %v1400 = vunpack.c.h.b16 %v1070
        %v1401 = vunpack.c.l.b16 %v1071
        %v1402 = vunpack.c.h.b16 %v1071
        %v1403 = vunpack.c.l.b16 %v1072
        %v1404 = vunpack.c.h.b16 %v1072
        %v1405 = vunpack.c.l.b16 %v1073
        %v1406 = vunpack.c.h.b16 %v1073
        %v1407 = vunpack.c.l.b16 %v1074
        %v1408 = vunpack.c.h.b16 %v1074
        %v1409 = vunpack.c.l.b16 %v1075
        %v1410 = vunpack.c.h.b16 %v1075
        %v1411 = vunpack.c.l.b16 %v1076
        %v1412 = vunpack.c.h.b16 %v1076
        %v1413 = vunpack.c.l.b16 %v1077
        %v1414 = vunpack.c.h.b16 %v1077
        %v1415 = vunpack.c.l.b16 %v1078
        %v1416 = vunpack.c.h.b16 %v1078
        %v1417 = vunpack.c.l.b16 %v1079
        %v1418 = vunpack.c.h.b16 %v1079
        %v1419 = vunpack.c.l.b16 %v1080
        %v1420 = vunpack.c.h.b16 %v1080
        %v1421 = vunpack.c.l.b16 %v1081
        %v1422 = vunpack.c.h.b16 %v1081
        %v1423 = vunpack.c.l.b16 %v1082
        %v1424 = vunpack.c.h.b16 %v1082
        %v1425 = vunpack.c.l.b16 %v1083
        %v1426 = vunpack.c.h.b16 %v1083
        %v1427 = vunpack.c.l.b16 %v1084
        %v1428 = vunpack.c.h.b16 %v1084
        %v1429 = vunpack.c.l.b16 %v1085
        %v1430 = vunpack.c.h.b16 %v1085
        %v1431 = vunpack.c.l.b16 %v1086
        %v1432 = vunpack.c.h.b16 %v1086
        %v1433 = vunpack.c.l.b16 %v1087
        %v1434 = vunpack.c.h.b16 %v1087
        %v1435 = vunpack.c.l.b16 %v1088
        %v1436 = vunpack.c.h.b16 %v1088
        %v1437 = vunpack.c.l.b16 %v1089
        %v1438 = vunpack.c.h.b16 %v1089
        %v1439 = vunpack.c.l.b16 %v1090
        %v1440 = vunpack.c.h.b16 %v1090
        %v1441 = vunpack.c.l.b16 %v1091
        %v1442 = vunpack.c.h.b16 %v1091
        %v1443 = vunpack.c.l.b16 %v1092
        %v1444 = vunpack.c.h.b16 %v1092
        %v1445 = vunpack.c.l.b16 %v1093
        %v1446 = vunpack.c.h.b16 %v1093
        %v1447 = vunpack.c.l.b16 %v1094
        %v1448 = vunpack.c.h.b16 %v1094
        %v1449 = vunpack.c.l.b16 %v1095
        %v1450 = vunpack.c.h.b16 %v1095
        %v1451 = vunpack.c.l.b16 %v1096
        %v1452 = vunpack.c.h.b16 %v1096
        %v1453 = vunpack.c.l.b16 %v1097
        %v1454 = vunpack.c.h.b16 %v1097
        %v1455 = vunpack.c.l.b16 %v1098
        %v1456 = vunpack.c.h.b16 %v1098
        %v1457 = vunpack.c.l.b16 %v1099
        %v1458 = vunpack.c.h.b16 %v1099
        %v1459 = vunpack.c.l.b16 %v1100
        %v1460 = vunpack.c.h.b16 %v1100
        %v1461 = vunpack.c.l.b16 %v1101
        %v1462 = vunpack.c.h.b16 %v1101
        %v1463 = vunpack.c.l.b16 %v1102
        %v1464 = vunpack.c.h.b16 %v1102
        %v1465 = vunpack.c.l.b16 %v1103
        %v1466 = vunpack.c.h.b16 %v1103
        %v1467 = vunpack.c.l.b16 %v1104
        %v1468 = vunpack.c.h.b16 %v1104
        %v1469 = vunpack.c.l.b16 %v1105
        %v1470 = vunpack.c.h.b16 %v1105
        %v1471 = vunpack.c.l.b16 %v1106
        %v1472 = vunpack.c.h.b16 %v1106
        %v1473 = vunpack.c.l.b16 %v1107
        %v1474 = vunpack.c.h.b16 %v1107
        %v1475 = vunpack.c.l.b16 %v1108
        %v1476 = vunpack.c.h.b16 %v1108
        %v1477 = vunpack.c.l.b16 %v1109
        %v1478 = vunpack.c.h.b16 %v1109
        %v1479 = vunpack.c.l.b16 %v1110
        %v1480 = vunpack.c.h.b16 %v1110
        %v1481 = vunpack.c.l.b16 %v1111
        %v1482 = vunpack.c.h.b16 %v1111
        %v1483 = vunpack.c.l.b16 %v1112
        %v1484 = vunpack.c.h.b16 %v1112
        %v1485 = vunpack.c.l.b16 %v1113
        %v1486 = vunpack.c.h.b16 %v1113
        %v1487 = vunpack.c.l.b16 %v1114
        %v1488 = vunpack.c.h.b16 %v1114
        %v1489 = vunpack.c.l.b16 %v1115
        %v1490 = vunpack.c.h.b16 %v1115
        %v1491 = vunpack.c.l.b16 %v1116
        %v1492 = vunpack.c.h.b16 %v1116
        %v1493 = vunpack.c.l.b16 %v1117
        %v1494 = vunpack.c.h.b16 %v1117
        %v1495 = vunpack.c.l.b16 %v1118
        %v1496 = vunpack.c.h.b16 %v1118
        %v1497 = vunpack.c.l.b16 %v1119
        %v1498 = vunpack.c.h.b16 %v1119
        %v1499 = vunpack.c.l.b16 %v1120
        %v1500 = vunpack.c.h.b16 %v1120
        %v1501 = vunpack.c.l.b16 %v1121
        %v1502 = vunpack.c.h.b16 %v1121
        %v1503 = vunpack.c.l.b16 %v1122
        %v1504 = vunpack.c.h.b16 %v1122
        %v1505 = vunpack.c.l.b16 %v1123
        %v1506 = vunpack.c.h.b16 %v1123
        %v1507 = vunpack.c.l.b16 %v1124
        %v1508 = vunpack.c.h.b16 %v1124
        %v1509 = vunpack.c.l.b16 %v1125
        %v1510 = vunpack.c.h.b16 %v1125
        %v1511 = vunpack.c.l.b16 %v1126
        %v1512 = vunpack.c.h.b16 %v1126
        %v1513 = vunpack.c.l.b16 %v1127
        %v1514 = vunpack.c.h.b16 %v1127
        %v1515 = vunpack.c.l.b16 %v1128
        %v1516 = vunpack.c.h.b16 %v1128
        %v1517 = vunpack.c.l.b16 %v1129
        %v1518 = vunpack.c.h.b16 %v1129
        %v1519 = vunpack.c.l.b16 %v1130
        %v1520 = vunpack.c.h.b16 %v1130
        %v1521 = vunpack.c.l.b16 %v1131
        %v1522 = vunpack.c.h.b16 %v1131
        %v1523 = vunpack.c.l.b16 %v1132
        %v1524 = vunpack.c.h.b16 %v1132
        %v1525 = vunpack.c.l.b16 %v1133
        %v1526 = vunpack.c.h.b16 %v1133
        %v1527 = vunpack.c.l.b16 %v1134
        %v1528 = vunpack.c.h.b16 %v1134
        %v1529 = vunpack.c.l.b16 %v1135
        %v1530 = vunpack.c.h.b16 %v1135
        %v1531 = vunpack.c.l.b16 %v1136
        %v1532 = vunpack.c.h.b16 %v1136
        %v1533 = vunpack.c.l.b16 %v1137
        %v1534 = vunpack.c.h.b16 %v1137
        %v1535 = vunpack.c.l.b16 %v1138
        %v1536 = vunpack.c.h.b16 %v1138
        %v1537 = vunpack.c.l.b16 %v1139
        %v1538 = vunpack.c.h.b16 %v1139
        %v1539 = vunpack.c.l.b16 %v1140
        %v1540 = vunpack.c.h.b16 %v1140
        %v1541 = vunpack.c.l.b16 %v1141
        %v1542 = vunpack.c.h.b16 %v1141
        %v1543 = vunpack.c.l.b16 %v1142
        %v1544 = vunpack.c.h.b16 %v1142
        %v1545 = vunpack.c.l.b16 %v1143
        %v1546 = vunpack.c.h.b16 %v1143
        %v1547 = vunpack.c.l.b16 %v1144
        %v1548 = vunpack.c.h.b16 %v1144
        %v1549 = vunpack.c.l.b16 %v1145
        %v1550 = vunpack.c.h.b16 %v1145
        %v1551 = vunpack.c.l.b16 %v1146
        %v1552 = vunpack.c.h.b16 %v1146
        %v1553 = vpack.c.b16 %v1301, %v1297
        %v1554 = vpack.c.b16 %v1302, %v1298
        %v1555 = vpack.c.b16 %v1303, %v1299
        %v1556 = vpack.c.b16 %v1304, %v1300
        %v1557 = vpack.c.b16 %v1309, %v1305
        %v1558 = vpack.c.b16 %v1310, %v1306
        %v1559 = vpack.c.b16 %v1311, %v1307
        %v1560 = vpack.c.b16 %v1312, %v1308
        %v1561 = vpack.c.b16 %v1317, %v1313
        %v1562 = vpack.c.b16 %v1318, %v1314
        %v1563 = vpack.c.b16 %v1319, %v1315
        %v1564 = vpack.c.b16 %v1320, %v1316
        %v1565 = vpack.c.b16 %v1325, %v1321
        %v1566 = vpack.c.b16 %v1326, %v1322
        %v1567 = vpack.c.b16 %v1327, %v1323
        %v1568 = vpack.c.b16 %v1328, %v1324
        %v1569 = vpack.c.b16 %v1333, %v1329
        %v1570 = vpack.c.b16 %v1334, %v1330
        %v1571 = vpack.c.b16 %v1335, %v1331
        %v1572 = vpack.c.b16 %v1336, %v1332
        %v1573 = vpack.c.b16 %v1341, %v1337
        %v1574 = vpack.c.b16 %v1342, %v1338
        %v1575 = vpack.c.b16 %v1343, %v1339
        %v1576 = vpack.c.b16 %v1344, %v1340
        %v1577 = vpack.c.b16 %v1349, %v1345
        %v1578 = vpack.c.b16 %v1350, %v1346
        %v1579 = vpack.c.b16 %v1351, %v1347
        %v1580 = vpack.c.b16 %v1352, %v1348
        %v1581 = vpack.c.b16 %v1357, %v1353
        %v1582 = vpack.c.b16 %v1358, %v1354
        %v1583 = vpack.c.b16 %v1359, %v1355
        %v1584 = vpack.c.b16 %v1360, %v1356
        %v1585 = vpack.c.b16 %v1365, %v1361
        %v1586 = vpack.c.b16 %v1366, %v1362
        %v1587 = vpack.c.b16 %v1367, %v1363
        %v1588 = vpack.c.b16 %v1368, %v1364
        %v1589 = vpack.c.b16 %v1373, %v1369
        %v1590 = vpack.c.b16 %v1374, %v1370
        %v1591 = vpack.c.b16 %v1375, %v1371
        %v1592 = vpack.c.b16 %v1376, %v1372
        %v1593 = vpack.c.b16 %v1381, %v1377
        %v1594 = vpack.c.b16 %v1382, %v1378
        %v1595 = vpack.c.b16 %v1383, %v1379
        %v1596 = vpack.c.b16 %v1384, %v1380
        %v1597 = vpack.c.b16 %v1389, %v1385
        %v1598 = vpack.c.b16 %v1390, %v1386
        %v1599 = vpack.c.b16 %v1391, %v1387
        %v1600 = vpack.c.b16 %v1392, %v1388
        %v1601 = vpack.c.b16 %v1397, %v1393
        %v1602 = vpack.c.b16 %v1398, %v1394
        %v1603 = vpack.c.b16 %v1399, %v1395
        %v1604 = vpack.c.b16 %v1400, %v1396
        %v1605 = vpack.c.b16 %v1405, %v1401
        %v1606 = vpack.c.b16 %v1406, %v1402
        %v1607 = vpack.c.b16 %v1407, %v1403
        %v1608 = vpack.c.b16 %v1408, %v1404
        %v1609 = vpack.c.b16 %v1413, %v1409
        %v1610 = vpack.c.b16 %v1414, %v1410
        %v1611 = vpack.c.b16 %v1415, %v1411
        %v1612 = vpack.c.b16 %v1416, %v1412
        %v1613 = vpack.c.b16 %v1421, %v1417
        %v1614 = vpack.c.b16 %v1422, %v1418
        %v1615 = vpack.c.b16 %v1423, %v1419
        %v1616 = vpack.c.b16 %v1424, %v1420
        %v1617 = vpack.c.b16 %v1429, %v1425
        %v1618 = vpack.c.b16 %v1430, %v1426
        %v1619 = vpack.c.b16 %v1431, %v1427
        %v1620 = vpack.c.b16 %v1432, %v1428
        %v1621 = vpack.c.b16 %v1437, %v1433
        %v1622 = vpack.c.b16 %v1438, %v1434
        %v1623 = vpack.c.b16 %v1439, %v1435
        %v1624 = vpack.c.b16 %v1440, %v1436
        %v1625 = vpack.c.b16 %v1445, %v1441
        %v1626 = vpack.c.b16 %v1446, %v1442
        %v1627 = vpack.c.b16 %v1447, %v1443
        %v1628 = vpack.c.b16 %v1448, %v1444
        %v1629 = vpack.c.b16 %v1453, %v1449
        %v1630 = vpack.c.b16 %v1454, %v1450
        %v1631 = vpack.c.b16 %v1455, %v1451
        %v1632 = vpack.c.b16 %v1456, %v1452
        %v1633 = vpack.c.b16 %v1461, %v1457
        %v1634 = vpack.c.b16 %v1462, %v1458
        %v1635 = vpack.c.b16 %v1463, %v1459
        %v1636 = vpack.c.b16 %v1464, %v1460
        %v1637 = vpack.c.b16 %v1469, %v1465
        %v1638 = vpack.c.b16 %v1470, %v1466
        %v1639 = vpack.c.b16 %v1471, %v1467
        %v1640 = vpack.c.b16 %v1472, %v1468
        %v1641 = vpack.c.b16 %v1477, %v1473
        %v1642 = vpack.c.b16 %v1478, %v1474
        %v1643 = vpack.c.b16 %v1479, %v1475
        %v1644 = vpack.c.b16 %v1480, %v1476
        %v1645 = vpack.c.b16 %v1485, %v1481
        %v1646 = vpack.c.b16 %v1486, %v1482
        %v1647 = vpack.c.b16 %v1487, %v1483
        %v1648 = vpack.c.b16 %v1488, %v1484
        %v1649 = vpack.c.b16 %v1493, %v1489
        %v1650 = vpack.c.b16 %v1494, %v1490
        %v1651 = vpack.c.b16 %v1495, %v1491
        %v1652 = vpack.c.b16 %v1496, %v1492
        %v1653 = vpack.c.b16 %v1501, %v1497
        %v1654 = vpack.c.b16 %v1502, %v1498
        %v1655 = vpack.c.b16 %v1503, %v1499
        %v1656 = vpack.c.b16 %v1504, %v1500
        %v1657 = vpack.c.b16 %v1509, %v1505
        %v1658 = vpack.c.b16 %v1510, %v1506
        %v1659 = vpack.c.b16 %v1511, %v1507
        %v1660 = vpack.c.b16 %v1512, %v1508
        %v1661 = vpack.c.b16 %v1517, %v1513
        %v1662 = vpack.c.b16 %v1518, %v1514
        %v1663 = vpack.c.b16 %v1519, %v1515
        %v1664 = vpack.c.b16 %v1520, %v1516
        %v1665 = vpack.c.b16 %v1525, %v1521
        %v1666 = vpack.c.b16 %v1526, %v1522
        %v1667 = vpack.c.b16 %v1527, %v1523
        %v1668 = vpack.c.b16 %v1528, %v1524
        %v1669 = vpack.c.b16 %v1533, %v1529
        %v1670 = vpack.c.b16 %v1534, %v1530
        %v1671 = vpack.c.b16 %v1535, %v1531
        %v1672 = vpack.c.b16 %v1536, %v1532
        %v1673 = vpack.c.b16 %v1541, %v1537
        %v1674 = vpack.c.b16 %v1542, %v1538
        %v1675 = vpack.c.b16 %v1543, %v1539
        %v1676 = vpack.c.b16 %v1544, %v1540
        %v1677 = vpack.c.b16 %v1549, %v1545
        %v1678 = vpack.c.b16 %v1550, %v1546
        %v1679 = vpack.c.b16 %v1551, %v1547
        %v1680 = vpack.c.b16 %v1552, %v1548
        %1809 = vmatprep.subr.bf16.mxu0 %v1582
        %1810 = vmatpush1.bf16.msra.mxu0 %v1581
        %1811 = vmatprep.subr.bf16.mxu0 %v1578
        %1812 = vmatpush1.bf16.msra.mxu0 %v1577
        %1813 = vmatprep.subr.bf16.mxu0 %v1574
        %1814 = vmatpush1.bf16.msra.mxu0 %v1573
        %1815 = vmatprep.subr.bf16.mxu0 %v1570
        %1816 = vmatpush1.bf16.msra.mxu0 %v1569
        %1817 = vmatprep.subr.bf16.mxu0 %v1566
        %1818 = vmatpush1.bf16.msra.mxu0 %v1565
        %1819 = vmatprep.subr.bf16.mxu0 %v1562
        %1820 = vmatpush1.bf16.msra.mxu0 %v1561
        %1821 = vmatprep.subr.bf16.mxu0 %v1558
        %1822 = vmatpush1.bf16.msra.mxu0 %v1557
        %1823 = vmatprep.subr.bf16.mxu0 %v1554
        %1824 = vmatpush1.bf16.msra.mxu0 %v1553
        %1825 = vmatprep.subr.bf16.mxu0 %v1614
        %1826 = vmatpush2.bf16.msra.mxu0 %v1613
        %1827 = vmatprep.subr.bf16.mxu0 %v1610
        %1828 = vmatpush2.bf16.msra.mxu0 %v1609
        %1829 = vmatprep.subr.bf16.mxu0 %v1606
        %1830 = vmatpush2.bf16.msra.mxu0 %v1605
        %1831 = vmatprep.subr.bf16.mxu0 %v1602
        %1832 = vmatpush2.bf16.msra.mxu0 %v1601
        %1833 = vmatprep.subr.bf16.mxu0 %v1598
        %1834 = vmatpush2.bf16.msra.mxu0 %v1597
        %1835 = vmatprep.subr.bf16.mxu0 %v1594
        %1836 = vmatpush2.bf16.msra.mxu0 %v1593
        %1837 = vmatprep.subr.bf16.mxu0 %v1590
        %1838 = vmatpush2.bf16.msra.mxu0 %v1589
        %1839 = vmatprep.subr.bf16.mxu0 %v1586
        %1840 = vmatpush2.bf16.msra.mxu0 %v1585
        %1841 = vmatprep.mubr.bf16.mxu0 %v980
        %1842 = vmatmul.mubr.bf16.gmra.mxu0 %v979
        %v1843 = vpop.f32.mrf.mxu0
        %v1844 = vadd.f32 %v1152, %v1843
        %v1845 = vpop.f32.mrf.mxu0
        %v1846 = vadd.f32 %v1156, %v1845
        %v1847 = vpop.f32.mrf.mxu0
        %v1848 = vadd.f32 %v1152, %v1847
        %v1849 = vpop.f32.mrf.mxu0
        %v1850 = vadd.f32 %v1156, %v1849
        %1851 = vmatprep.mubr.bf16.mxu0 %v984
        %1852 = vmatmul.mubr.bf16.gmra.mxu0 %v983
        %v1853 = vpop.f32.mrf.mxu0
        %v1854 = vadd.f32 %v1152, %v1853
        %v1855 = vpop.f32.mrf.mxu0
        %v1856 = vadd.f32 %v1156, %v1855
        %v1857 = vpop.f32.mrf.mxu0
        %v1858 = vadd.f32 %v1152, %v1857
        %v1859 = vpop.f32.mrf.mxu0
        %v1860 = vadd.f32 %v1156, %v1859
        %1861 = vmatprep.mubr.bf16.mxu0 %v988
        %1862 = vmatmul.mubr.bf16.gmra.mxu0 %v987
        %v1863 = vpop.f32.mrf.mxu0
        %v1864 = vadd.f32 %v1152, %v1863
        %v1865 = vpop.f32.mrf.mxu0
        %v1866 = vadd.f32 %v1156, %v1865
        %v1867 = vpop.f32.mrf.mxu0
        %v1868 = vadd.f32 %v1152, %v1867
        %v1869 = vpop.f32.mrf.mxu0
        %v1870 = vadd.f32 %v1156, %v1869
        %1871 = vmatprep.mubr.bf16.mxu0 %v992
        %1872 = vmatmul.mubr.bf16.gmra.mxu0 %v991
        %v1873 = vpop.f32.mrf.mxu0
        %v1874 = vadd.f32 %v1152, %v1873
        %v1875 = vpop.f32.mrf.mxu0
        %v1876 = vadd.f32 %v1156, %v1875
        %v1877 = vpop.f32.mrf.mxu0
        %v1878 = vadd.f32 %v1152, %v1877
        %v1879 = vpop.f32.mrf.mxu0
        %v1880 = vadd.f32 %v1156, %v1879
        %1881 = vmatprep.mubr.bf16.mxu0 %v996
        %1882 = vmatmul.mubr.bf16.gmra.mxu0 %v995
        %v1883 = vpop.f32.mrf.mxu0
        %v1884 = vadd.f32 %v1152, %v1883
        %v1885 = vpop.f32.mrf.mxu0
        %v1886 = vadd.f32 %v1156, %v1885
        %v1887 = vpop.f32.mrf.mxu0
        %v1888 = vadd.f32 %v1152, %v1887
        %v1889 = vpop.f32.mrf.mxu0
        %v1890 = vadd.f32 %v1156, %v1889
        %1891 = vmatprep.mubr.bf16.mxu0 %v1000
        %1892 = vmatmul.mubr.bf16.gmra.mxu0 %v999
        %v1893 = vpop.f32.mrf.mxu0
        %v1894 = vadd.f32 %v1152, %v1893
        %v1895 = vpop.f32.mrf.mxu0
        %v1896 = vadd.f32 %v1156, %v1895
        %v1897 = vpop.f32.mrf.mxu0
        %v1898 = vadd.f32 %v1152, %v1897
        %v1899 = vpop.f32.mrf.mxu0
        %v1900 = vadd.f32 %v1156, %v1899
        %1901 = vmatprep.mubr.bf16.mxu0 %v1004
        %1902 = vmatmul.mubr.bf16.gmra.mxu0 %v1003
        %v1903 = vpop.f32.mrf.mxu0
        %v1904 = vadd.f32 %v1152, %v1903
        %v1905 = vpop.f32.mrf.mxu0
        %v1906 = vadd.f32 %v1156, %v1905
        %v1907 = vpop.f32.mrf.mxu0
        %v1908 = vadd.f32 %v1152, %v1907
        %v1909 = vpop.f32.mrf.mxu0
        %v1910 = vadd.f32 %v1156, %v1909
        %1911 = vmatprep.mubr.bf16.mxu0 %v1008
        %1912 = vmatmul.mubr.bf16.gmra.mxu0 %v1007
        %v1913 = vpop.f32.mrf.mxu0
        %v1914 = vadd.f32 %v1152, %v1913
        %v1915 = vpop.f32.mrf.mxu0
        %v1916 = vadd.f32 %v1156, %v1915
        %v1917 = vpop.f32.mrf.mxu0
        %v1918 = vadd.f32 %v1152, %v1917
        %v1919 = vpop.f32.mrf.mxu0
        %v1920 = vadd.f32 %v1156, %v1919
        %1921 = vmatprep.mubr.bf16.mxu0 %v1012
        %1922 = vmatmul.mubr.bf16.gmra.mxu0 %v1011
        %v1923 = vpop.f32.mrf.mxu0
        %v1924 = vadd.f32 %v1152, %v1923
        %v1925 = vpop.f32.mrf.mxu0
        %v1926 = vadd.f32 %v1156, %v1925
        %v1927 = vpop.f32.mrf.mxu0
        %v1928 = vadd.f32 %v1152, %v1927
        %v1929 = vpop.f32.mrf.mxu0
        %v1930 = vadd.f32 %v1156, %v1929
        %1931 = vmatprep.mubr.bf16.mxu0 %v1016
        %1932 = vmatmul.mubr.bf16.gmra.mxu0 %v1015
        %v1933 = vpop.f32.mrf.mxu0
        %v1934 = vadd.f32 %v1152, %v1933
        %v1935 = vpop.f32.mrf.mxu0
        %v1936 = vadd.f32 %v1156, %v1935
        %v1937 = vpop.f32.mrf.mxu0
        %v1938 = vpop.f32.mrf.mxu0
        %1939 = vdwg.mxu0
        %1940 = vmatprep.subr.bf16.mxu0 %v1646
        %1941 = vmatpush1.bf16.msra.mxu0 %v1645
        %1942 = vmatprep.subr.bf16.mxu0 %v1642
        %1943 = vmatpush1.bf16.msra.mxu0 %v1641
        %1944 = vmatprep.subr.bf16.mxu0 %v1638
        %1945 = vmatpush1.bf16.msra.mxu0 %v1637
        %1946 = vmatprep.subr.bf16.mxu0 %v1634
        %1947 = vmatpush1.bf16.msra.mxu0 %v1633
        %1948 = vmatprep.subr.bf16.mxu0 %v1630
        %1949 = vmatpush1.bf16.msra.mxu0 %v1629
        %1950 = vmatprep.subr.bf16.mxu0 %v1626
        %1951 = vmatpush1.bf16.msra.mxu0 %v1625
        %1952 = vmatprep.subr.bf16.mxu0 %v1622
        %1953 = vmatpush1.bf16.msra.mxu0 %v1621
        %1954 = vmatprep.subr.bf16.mxu0 %v1618
        %1955 = vmatpush1.bf16.msra.mxu0 %v1617
        %1956 = vmatprep.subr.bf16.mxu0 %v1678
        %1957 = vmatpush2.bf16.msra.mxu0 %v1677
        %1958 = vmatprep.subr.bf16.mxu0 %v1674
        %1959 = vmatpush2.bf16.msra.mxu0 %v1673
        %1960 = vmatprep.subr.bf16.mxu0 %v1670
        %1961 = vmatpush2.bf16.msra.mxu0 %v1669
        %1962 = vmatprep.subr.bf16.mxu0 %v1666
        %1963 = vmatpush2.bf16.msra.mxu0 %v1665
        %1964 = vmatprep.subr.bf16.mxu0 %v1662
        %1965 = vmatpush2.bf16.msra.mxu0 %v1661
        %1966 = vmatprep.subr.bf16.mxu0 %v1658
        %1967 = vmatpush2.bf16.msra.mxu0 %v1657
        %1968 = vmatprep.subr.bf16.mxu0 %v1654
        %1969 = vmatpush2.bf16.msra.mxu0 %v1653
        %1970 = vmatprep.subr.bf16.mxu0 %v1650
        %1971 = vmatpush2.bf16.msra.mxu0 %v1649
        %1972 = vmatprep.mubr.bf16.mxu0 %v982
        %1973 = vmatmul.mubr.bf16.gmra.mxu0 %v981
        %v1974 = vpop.f32.mrf.mxu0
        %v1975 = vadd.f32 %v1844, %v1974
        %v1976 = vpop.f32.mrf.mxu0
        %v1977 = vadd.f32 %v1846, %v1976
        %v1978 = vpop.f32.mrf.mxu0
        %v1979 = vadd.f32 %v1848, %v1978
        %v1980 = vpop.f32.mrf.mxu0
        %v1981 = vadd.f32 %v1850, %v1980
        %1982 = vmatprep.mubr.bf16.mxu0 %v986
        %1983 = vmatmul.mubr.bf16.gmra.mxu0 %v985
        %v1984 = vpop.f32.mrf.mxu0
        %v1985 = vadd.f32 %v1854, %v1984
        %v1986 = vpop.f32.mrf.mxu0
        %v1987 = vadd.f32 %v1856, %v1986
        %v1988 = vpop.f32.mrf.mxu0
        %v1989 = vadd.f32 %v1858, %v1988
        %v1990 = vpop.f32.mrf.mxu0
        %v1991 = vadd.f32 %v1860, %v1990
        %1992 = vmatprep.mubr.bf16.mxu0 %v990
        %1993 = vmatmul.mubr.bf16.gmra.mxu0 %v989
        %v1994 = vpop.f32.mrf.mxu0
        %v1995 = vadd.f32 %v1864, %v1994
        %v1996 = vpop.f32.mrf.mxu0
        %v1997 = vadd.f32 %v1866, %v1996
        %v1998 = vpop.f32.mrf.mxu0
        %v1999 = vadd.f32 %v1868, %v1998
        %v2000 = vpop.f32.mrf.mxu0
        %v2001 = vadd.f32 %v1870, %v2000
        %2002 = vmatprep.mubr.bf16.mxu0 %v994
        %2003 = vmatmul.mubr.bf16.gmra.mxu0 %v993
        %v2004 = vpop.f32.mrf.mxu0
        %v2005 = vadd.f32 %v1874, %v2004
        %v2006 = vpop.f32.mrf.mxu0
        %v2007 = vadd.f32 %v1876, %v2006
        %v2008 = vpop.f32.mrf.mxu0
        %v2009 = vadd.f32 %v1878, %v2008
        %v2010 = vpop.f32.mrf.mxu0
        %v2011 = vadd.f32 %v1880, %v2010
        %2012 = vmatprep.mubr.bf16.mxu0 %v998
        %2013 = vmatmul.mubr.bf16.gmra.mxu0 %v997
        %v2014 = vpop.f32.mrf.mxu0
        %v2015 = vadd.f32 %v1884, %v2014
        %v2016 = vpop.f32.mrf.mxu0
        %v2017 = vadd.f32 %v1886, %v2016
        %v2018 = vpop.f32.mrf.mxu0
        %v2019 = vadd.f32 %v1888, %v2018
        %v2020 = vpop.f32.mrf.mxu0
        %v2021 = vadd.f32 %v1890, %v2020
        %2022 = vmatprep.mubr.bf16.mxu0 %v1002
        %2023 = vmatmul.mubr.bf16.gmra.mxu0 %v1001
        %v2024 = vpop.f32.mrf.mxu0
        %v2025 = vadd.f32 %v1894, %v2024
        %v2026 = vpop.f32.mrf.mxu0
        %v2027 = vadd.f32 %v1896, %v2026
        %v2028 = vpop.f32.mrf.mxu0
        %v2029 = vadd.f32 %v1898, %v2028
        %v2030 = vpop.f32.mrf.mxu0
        %v2031 = vadd.f32 %v1900, %v2030
        %2032 = vmatprep.mubr.bf16.mxu0 %v1006
        %2033 = vmatmul.mubr.bf16.gmra.mxu0 %v1005
        %v2034 = vpop.f32.mrf.mxu0
        %v2035 = vadd.f32 %v1904, %v2034
        %v2036 = vpop.f32.mrf.mxu0
        %v2037 = vadd.f32 %v1906, %v2036
        %v2038 = vpop.f32.mrf.mxu0
        %v2039 = vadd.f32 %v1908, %v2038
        %v2040 = vpop.f32.mrf.mxu0
        %v2041 = vadd.f32 %v1910, %v2040
        %2042 = vmatprep.mubr.bf16.mxu0 %v1010
        %2043 = vmatmul.mubr.bf16.gmra.mxu0 %v1009
        %v2044 = vpop.f32.mrf.mxu0
        %v2045 = vadd.f32 %v1914, %v2044
        %v2046 = vpop.f32.mrf.mxu0
        %v2047 = vadd.f32 %v1916, %v2046
        %v2048 = vpop.f32.mrf.mxu0
        %v2049 = vadd.f32 %v1918, %v2048
        %v2050 = vpop.f32.mrf.mxu0
        %v2051 = vadd.f32 %v1920, %v2050
        %2052 = vmatprep.mubr.bf16.mxu0 %v1014
        %2053 = vmatmul.mubr.bf16.gmra.mxu0 %v1013
        %v2054 = vpop.f32.mrf.mxu0
        %v2055 = vadd.f32 %v1924, %v2054
        %v2056 = vpop.f32.mrf.mxu0
        %v2057 = vadd.f32 %v1926, %v2056
        %v2058 = vpop.f32.mrf.mxu0
        %v2059 = vadd.f32 %v1928, %v2058
        %v2060 = vpop.f32.mrf.mxu0
        %v2061 = vadd.f32 %v1930, %v2060
        %2062 = vmatprep.mubr.bf16.mxu0 %v1018
        %2063 = vmatmul.mubr.bf16.gmra.mxu0 %v1017
        %v2064 = vpop.f32.mrf.mxu0
        %v2065 = vadd.f32 %v1934, %v2064
        %v2066 = vpop.f32.mrf.mxu0
        %v2067 = vadd.f32 %v1936, %v2066
        %v2068 = vpop.f32.mrf.mxu0
        %v2069 = vpop.f32.mrf.mxu0
        %2070 = vdwg.mxu0
        %2071 = vmatprep.subr.bf16.mxu0 %v1584
        %2072 = vmatpush1.bf16.msra.mxu0 %v1583
        %2073 = vmatprep.subr.bf16.mxu0 %v1580
        %2074 = vmatpush1.bf16.msra.mxu0 %v1579
        %2075 = vmatprep.subr.bf16.mxu0 %v1576
        %2076 = vmatpush1.bf16.msra.mxu0 %v1575
        %2077 = vmatprep.subr.bf16.mxu0 %v1572
        %2078 = vmatpush1.bf16.msra.mxu0 %v1571
        %2079 = vmatprep.subr.bf16.mxu0 %v1568
        %2080 = vmatpush1.bf16.msra.mxu0 %v1567
        %2081 = vmatprep.subr.bf16.mxu0 %v1564
        %2082 = vmatpush1.bf16.msra.mxu0 %v1563
        %2083 = vmatprep.subr.bf16.mxu0 %v1560
        %2084 = vmatpush1.bf16.msra.mxu0 %v1559
        %2085 = vmatprep.subr.bf16.mxu0 %v1556
        %2086 = vmatpush1.bf16.msra.mxu0 %v1555
        %2087 = vmatprep.subr.bf16.mxu0 %v1616
        %2088 = vmatpush2.bf16.msra.mxu0 %v1615
        %2089 = vmatprep.subr.bf16.mxu0 %v1612
        %2090 = vmatpush2.bf16.msra.mxu0 %v1611
        %2091 = vmatprep.subr.bf16.mxu0 %v1608
        %2092 = vmatpush2.bf16.msra.mxu0 %v1607
        %2093 = vmatprep.subr.bf16.mxu0 %v1604
        %2094 = vmatpush2.bf16.msra.mxu0 %v1603
        %2095 = vmatprep.subr.bf16.mxu0 %v1600
        %2096 = vmatpush2.bf16.msra.mxu0 %v1599
        %2097 = vmatprep.subr.bf16.mxu0 %v1596
        %2098 = vmatpush2.bf16.msra.mxu0 %v1595
        %2099 = vmatprep.subr.bf16.mxu0 %v1592
        %2100 = vmatpush2.bf16.msra.mxu0 %v1591
        %2101 = vmatprep.subr.bf16.mxu0 %v1588
        %2102 = vmatpush2.bf16.msra.mxu0 %v1587
        %2103 = vmatprep.mubr.bf16.mxu0 %v980
        %2104 = vmatmul.mubr.bf16.gmra.mxu0 %v979
        %v2105 = vpop.f32.mrf.mxu0
        %v2106 = vadd.f32 %v1160, %v2105
        %v2107 = vpop.f32.mrf.mxu0
        %v2108 = vadd.f32 %v1164, %v2107
        %v2109 = vpop.f32.mrf.mxu0
        %v2110 = vadd.f32 %v1160, %v2109
        %v2111 = vpop.f32.mrf.mxu0
        %v2112 = vadd.f32 %v1164, %v2111
        %2113 = vmatprep.mubr.bf16.mxu0 %v984
        %2114 = vmatmul.mubr.bf16.gmra.mxu0 %v983
        %v2115 = vpop.f32.mrf.mxu0
        %v2116 = vadd.f32 %v1160, %v2115
        %v2117 = vpop.f32.mrf.mxu0
        %v2118 = vadd.f32 %v1164, %v2117
        %v2119 = vpop.f32.mrf.mxu0
        %v2120 = vadd.f32 %v1160, %v2119
        %v2121 = vpop.f32.mrf.mxu0
        %v2122 = vadd.f32 %v1164, %v2121
        %2123 = vmatprep.mubr.bf16.mxu0 %v988
        %2124 = vmatmul.mubr.bf16.gmra.mxu0 %v987
        %v2125 = vpop.f32.mrf.mxu0
        %v2126 = vadd.f32 %v1160, %v2125
        %v2127 = vpop.f32.mrf.mxu0
        %v2128 = vadd.f32 %v1164, %v2127
        %v2129 = vpop.f32.mrf.mxu0
        %v2130 = vadd.f32 %v1160, %v2129
        %v2131 = vpop.f32.mrf.mxu0
        %v2132 = vadd.f32 %v1164, %v2131
        %2133 = vmatprep.mubr.bf16.mxu0 %v992
        %2134 = vmatmul.mubr.bf16.gmra.mxu0 %v991
        %v2135 = vpop.f32.mrf.mxu0
        %v2136 = vadd.f32 %v1160, %v2135
        %v2137 = vpop.f32.mrf.mxu0
        %v2138 = vadd.f32 %v1164, %v2137
        %v2139 = vpop.f32.mrf.mxu0
        %v2140 = vadd.f32 %v1160, %v2139
        %v2141 = vpop.f32.mrf.mxu0
        %v2142 = vadd.f32 %v1164, %v2141
        %2143 = vmatprep.mubr.bf16.mxu0 %v996
        %2144 = vmatmul.mubr.bf16.gmra.mxu0 %v995
        %v2145 = vpop.f32.mrf.mxu0
        %v2146 = vadd.f32 %v1160, %v2145
        %v2147 = vpop.f32.mrf.mxu0
        %v2148 = vadd.f32 %v1164, %v2147
        %v2149 = vpop.f32.mrf.mxu0
        %v2150 = vadd.f32 %v1160, %v2149
        %v2151 = vpop.f32.mrf.mxu0
        %v2152 = vadd.f32 %v1164, %v2151
        %2153 = vmatprep.mubr.bf16.mxu0 %v1000
        %2154 = vmatmul.mubr.bf16.gmra.mxu0 %v999
        %v2155 = vpop.f32.mrf.mxu0
        %v2156 = vadd.f32 %v1160, %v2155
        %v2157 = vpop.f32.mrf.mxu0
        %v2158 = vadd.f32 %v1164, %v2157
        %v2159 = vpop.f32.mrf.mxu0
        %v2160 = vadd.f32 %v1160, %v2159
        %v2161 = vpop.f32.mrf.mxu0
        %v2162 = vadd.f32 %v1164, %v2161
        %2163 = vmatprep.mubr.bf16.mxu0 %v1004
        %2164 = vmatmul.mubr.bf16.gmra.mxu0 %v1003
        %v2165 = vpop.f32.mrf.mxu0
        %v2166 = vadd.f32 %v1160, %v2165
        %v2167 = vpop.f32.mrf.mxu0
        %v2168 = vadd.f32 %v1164, %v2167
        %v2169 = vpop.f32.mrf.mxu0
        %v2170 = vadd.f32 %v1160, %v2169
        %v2171 = vpop.f32.mrf.mxu0
        %v2172 = vadd.f32 %v1164, %v2171
        %2173 = vmatprep.mubr.bf16.mxu0 %v1008
        %2174 = vmatmul.mubr.bf16.gmra.mxu0 %v1007
        %v2175 = vpop.f32.mrf.mxu0
        %v2176 = vadd.f32 %v1160, %v2175
        %v2177 = vpop.f32.mrf.mxu0
        %v2178 = vadd.f32 %v1164, %v2177
        %v2179 = vpop.f32.mrf.mxu0
        %v2180 = vadd.f32 %v1160, %v2179
        %v2181 = vpop.f32.mrf.mxu0
        %v2182 = vadd.f32 %v1164, %v2181
        %2183 = vmatprep.mubr.bf16.mxu0 %v1012
        %2184 = vmatmul.mubr.bf16.gmra.mxu0 %v1011
        %v2185 = vpop.f32.mrf.mxu0
        %v2186 = vadd.f32 %v1160, %v2185
        %v2187 = vpop.f32.mrf.mxu0
        %v2188 = vadd.f32 %v1164, %v2187
        %v2189 = vpop.f32.mrf.mxu0
        %v2190 = vadd.f32 %v1160, %v2189
        %v2191 = vpop.f32.mrf.mxu0
        %v2192 = vadd.f32 %v1164, %v2191
        %2193 = vmatprep.mubr.bf16.mxu0 %v1016
        %2194 = vmatmul.mubr.bf16.gmra.mxu0 %v1015
        %v2195 = vpop.f32.mrf.mxu0
        %v2196 = vadd.f32 %v1160, %v2195
        %v2197 = vpop.f32.mrf.mxu0
        %v2198 = vadd.f32 %v1164, %v2197
        %v2199 = vpop.f32.mrf.mxu0
        %v2200 = vpop.f32.mrf.mxu0
        %2201 = vdwg.mxu0
        %2202 = vmatprep.subr.bf16.mxu0 %v1648
        %2203 = vmatpush1.bf16.msra.mxu0 %v1647
        %2204 = vmatprep.subr.bf16.mxu0 %v1644
        %2205 = vmatpush1.bf16.msra.mxu0 %v1643
        %2206 = vmatprep.subr.bf16.mxu0 %v1640
        %2207 = vmatpush1.bf16.msra.mxu0 %v1639
        %2208 = vmatprep.subr.bf16.mxu0 %v1636
        %2209 = vmatpush1.bf16.msra.mxu0 %v1635
        %2210 = vmatprep.subr.bf16.mxu0 %v1632
        %2211 = vmatpush1.bf16.msra.mxu0 %v1631
        %2212 = vmatprep.subr.bf16.mxu0 %v1628
        %2213 = vmatpush1.bf16.msra.mxu0 %v1627
        %2214 = vmatprep.subr.bf16.mxu0 %v1624
        %2215 = vmatpush1.bf16.msra.mxu0 %v1623
        %2216 = vmatprep.subr.bf16.mxu0 %v1620
        %2217 = vmatpush1.bf16.msra.mxu0 %v1619
        %2218 = vmatprep.subr.bf16.mxu0 %v1680
        %2219 = vmatpush2.bf16.msra.mxu0 %v1679
        %2220 = vmatprep.subr.bf16.mxu0 %v1676
        %2221 = vmatpush2.bf16.msra.mxu0 %v1675
        %2222 = vmatprep.subr.bf16.mxu0 %v1672
        %2223 = vmatpush2.bf16.msra.mxu0 %v1671
        %2224 = vmatprep.subr.bf16.mxu0 %v1668
        %2225 = vmatpush2.bf16.msra.mxu0 %v1667
        %2226 = vmatprep.subr.bf16.mxu0 %v1664
        %2227 = vmatpush2.bf16.msra.mxu0 %v1663
        %2228 = vmatprep.subr.bf16.mxu0 %v1660
        %2229 = vmatpush2.bf16.msra.mxu0 %v1659
        %2230 = vmatprep.subr.bf16.mxu0 %v1656
        %2231 = vmatpush2.bf16.msra.mxu0 %v1655
        %2232 = vmatprep.subr.bf16.mxu0 %v1652
        %2233 = vmatpush2.bf16.msra.mxu0 %v1651
        %2234 = vmatprep.mubr.bf16.mxu0 %v982
        %2235 = vmatmul.mubr.bf16.gmra.mxu0 %v981
        %v2236 = vpop.f32.mrf.mxu0
        %v2237 = vadd.f32 %v2106, %v2236
        %v2238 = vpop.f32.mrf.mxu0
        %v2239 = vadd.f32 %v2108, %v2238
        %v2240 = vpop.f32.mrf.mxu0
        %v2241 = vadd.f32 %v2110, %v2240
        %v2242 = vpop.f32.mrf.mxu0
        %v2243 = vadd.f32 %v2112, %v2242
        %2244 = vmatprep.mubr.bf16.mxu0 %v986
        %2245 = vmatmul.mubr.bf16.gmra.mxu0 %v985
        %v2246 = vpop.f32.mrf.mxu0
        %v2247 = vadd.f32 %v2116, %v2246
        %v2248 = vpop.f32.mrf.mxu0
        %v2249 = vadd.f32 %v2118, %v2248
        %v2250 = vpop.f32.mrf.mxu0
        %v2251 = vadd.f32 %v2120, %v2250
        %v2252 = vpop.f32.mrf.mxu0
        %v2253 = vadd.f32 %v2122, %v2252
        %2254 = vmatprep.mubr.bf16.mxu0 %v990
        %2255 = vmatmul.mubr.bf16.gmra.mxu0 %v989
        %v2256 = vpop.f32.mrf.mxu0
        %v2257 = vadd.f32 %v2126, %v2256
        %v2258 = vpop.f32.mrf.mxu0
        %v2259 = vadd.f32 %v2128, %v2258
        %v2260 = vpop.f32.mrf.mxu0
        %v2261 = vadd.f32 %v2130, %v2260
        %v2262 = vpop.f32.mrf.mxu0
        %v2263 = vadd.f32 %v2132, %v2262
        %2264 = vmatprep.mubr.bf16.mxu0 %v994
        %2265 = vmatmul.mubr.bf16.gmra.mxu0 %v993
        %v2266 = vpop.f32.mrf.mxu0
        %v2267 = vadd.f32 %v2136, %v2266
        %v2268 = vpop.f32.mrf.mxu0
        %v2269 = vadd.f32 %v2138, %v2268
        %v2270 = vpop.f32.mrf.mxu0
        %v2271 = vadd.f32 %v2140, %v2270
        %v2272 = vpop.f32.mrf.mxu0
        %v2273 = vadd.f32 %v2142, %v2272
        %2274 = vmatprep.mubr.bf16.mxu0 %v998
        %2275 = vmatmul.mubr.bf16.gmra.mxu0 %v997
        %v2276 = vpop.f32.mrf.mxu0
        %v2277 = vadd.f32 %v2146, %v2276
        %v2278 = vpop.f32.mrf.mxu0
        %v2279 = vadd.f32 %v2148, %v2278
        %v2280 = vpop.f32.mrf.mxu0
        %v2281 = vadd.f32 %v2150, %v2280
        %v2282 = vpop.f32.mrf.mxu0
        %v2283 = vadd.f32 %v2152, %v2282
        %2284 = vmatprep.mubr.bf16.mxu0 %v1002
        %2285 = vmatmul.mubr.bf16.gmra.mxu0 %v1001
        %v2286 = vpop.f32.mrf.mxu0
        %v2287 = vadd.f32 %v2156, %v2286
        %v2288 = vpop.f32.mrf.mxu0
        %v2289 = vadd.f32 %v2158, %v2288
        %v2290 = vpop.f32.mrf.mxu0
        %v2291 = vadd.f32 %v2160, %v2290
        %v2292 = vpop.f32.mrf.mxu0
        %v2293 = vadd.f32 %v2162, %v2292
        %2294 = vmatprep.mubr.bf16.mxu0 %v1006
        %2295 = vmatmul.mubr.bf16.gmra.mxu0 %v1005
        %v2296 = vpop.f32.mrf.mxu0
        %v2297 = vadd.f32 %v2166, %v2296
        %v2298 = vpop.f32.mrf.mxu0
        %v2299 = vadd.f32 %v2168, %v2298
        %v2300 = vpop.f32.mrf.mxu0
        %v2301 = vadd.f32 %v2170, %v2300
        %v2302 = vpop.f32.mrf.mxu0
        %v2303 = vadd.f32 %v2172, %v2302
        %2304 = vmatprep.mubr.bf16.mxu0 %v1010
        %2305 = vmatmul.mubr.bf16.gmra.mxu0 %v1009
        %v2306 = vpop.f32.mrf.mxu0
        %v2307 = vadd.f32 %v2176, %v2306
        %v2308 = vpop.f32.mrf.mxu0
        %v2309 = vadd.f32 %v2178, %v2308
        %v2310 = vpop.f32.mrf.mxu0
        %v2311 = vadd.f32 %v2180, %v2310
        %v2312 = vpop.f32.mrf.mxu0
        %v2313 = vadd.f32 %v2182, %v2312
        %2314 = vmatprep.mubr.bf16.mxu0 %v1014
        %2315 = vmatmul.mubr.bf16.gmra.mxu0 %v1013
        %v2316 = vpop.f32.mrf.mxu0
        %v2317 = vadd.f32 %v2186, %v2316
        %v2318 = vpop.f32.mrf.mxu0
        %v2319 = vadd.f32 %v2188, %v2318
        %v2320 = vpop.f32.mrf.mxu0
        %v2321 = vadd.f32 %v2190, %v2320
        %v2322 = vpop.f32.mrf.mxu0
        %v2323 = vadd.f32 %v2192, %v2322
        %2324 = vmatprep.mubr.bf16.mxu0 %v1018
        %2325 = vmatmul.mubr.bf16.gmra.mxu0 %v1017
        %v2326 = vpop.f32.mrf.mxu0
        %v2327 = vadd.f32 %v2196, %v2326
        %v2328 = vpop.f32.mrf.mxu0
        %v2329 = vadd.f32 %v2198, %v2328
        %v2330 = vpop.f32.mrf.mxu0
        %v2331 = vpop.f32.mrf.mxu0
        %2332 = vdwg.mxu0
        %v2333 = vadd.f32 %v219, %v1975
        %v2334 = vadd.f32 %v220, %v1977
        %v2335 = vadd.f32 %v221, %v2237
        %v2336 = vadd.f32 %v222, %v2239
        %v2337 = vadd.f32 %v223, %v1979
        %v2338 = vadd.f32 %v224, %v1981
        %v2339 = vadd.f32 %v225, %v2241
        %v2340 = vadd.f32 %v226, %v2243
        %v2341 = vadd.f32 %v227, %v1985
        %v2342 = vadd.f32 %v228, %v1987
        %v2343 = vadd.f32 %v229, %v2247
        %v2344 = vadd.f32 %v230, %v2249
        %v2345 = vadd.f32 %v231, %v1989
        %v2346 = vadd.f32 %v232, %v1991
        %v2347 = vadd.f32 %v233, %v2251
        %v2348 = vadd.f32 %v234, %v2253
        %v2349 = vadd.f32 %v235, %v1995
        %v2350 = vadd.f32 %v236, %v1997
        %v2351 = vadd.f32 %v237, %v2257
        %v2352 = vadd.f32 %v238, %v2259
        %v2353 = vadd.f32 %v239, %v1999
        %v2354 = vadd.f32 %v240, %v2001
        %v2355 = vadd.f32 %v241, %v2261
        %v2356 = vadd.f32 %v242, %v2263
        %v2357 = vadd.f32 %v243, %v2005
        %v2358 = vadd.f32 %v244, %v2007
        %v2359 = vadd.f32 %v245, %v2267
        %v2360 = vadd.f32 %v246, %v2269
        %v2361 = vadd.f32 %v247, %v2009
        %v2362 = vadd.f32 %v248, %v2011
        %v2363 = vadd.f32 %v249, %v2271
        %v2364 = vadd.f32 %v250, %v2273
        %v2365 = vadd.f32 %v251, %v2015
        %v2366 = vadd.f32 %v252, %v2017
        %v2367 = vadd.f32 %v253, %v2277
        %v2368 = vadd.f32 %v254, %v2279
        %v2369 = vadd.f32 %v255, %v2019
        %v2370 = vadd.f32 %v256, %v2021
        %v2371 = vadd.f32 %v257, %v2281
        %v2372 = vadd.f32 %v258, %v2283
        %v2373 = vadd.f32 %v259, %v2025
        %v2374 = vadd.f32 %v260, %v2027
        %v2375 = vadd.f32 %v261, %v2287
        %v2376 = vadd.f32 %v262, %v2289
        %v2377 = vadd.f32 %v263, %v2029
        %v2378 = vadd.f32 %v264, %v2031
        %v2379 = vadd.f32 %v265, %v2291
        %v2380 = vadd.f32 %v266, %v2293
        %v2381 = vadd.f32 %v267, %v2035
        %v2382 = vadd.f32 %v268, %v2037
        %v2383 = vadd.f32 %v269, %v2297
        %v2384 = vadd.f32 %v270, %v2299
        %v2385 = vadd.f32 %v271, %v2039
        %v2386 = vadd.f32 %v272, %v2041
        %v2387 = vadd.f32 %v273, %v2301
        %v2388 = vadd.f32 %v274, %v2303
        %v2389 = vadd.f32 %v275, %v2045
        %v2390 = vadd.f32 %v276, %v2047
        %v2391 = vadd.f32 %v277, %v2307
        %v2392 = vadd.f32 %v278, %v2309
        %v2393 = vadd.f32 %v279, %v2049
        %v2394 = vadd.f32 %v280, %v2051
        %v2395 = vadd.f32 %v281, %v2311
        %v2396 = vadd.f32 %v282, %v2313
        %v2397 = vadd.f32 %v283, %v2055
        %v2398 = vadd.f32 %v284, %v2057
        %v2399 = vadd.f32 %v285, %v2317
        %v2400 = vadd.f32 %v286, %v2319
        %v2401 = vadd.f32 %v287, %v2059
        %v2402 = vadd.f32 %v288, %v2061
        %v2403 = vadd.f32 %v289, %v2321
        %v2404 = vadd.f32 %v290, %v2323
        %v2405 = vadd.f32 %v291, %v2065
        %v2406 = vadd.f32 %v292, %v2067
        %v2407 = vadd.f32 %v293, %v2327
        %v2408 = vadd.f32 %v294, %v2329
        %2409 = vst [vmem:[%s216] sm:$0xff] %v2333
        %2410 = vst [vmem:[%s216 + $0x8] sm:$0xff] %v2334
        %2411 = vst [vmem:[%s216 + $0x10] sm:$0xff] %v2335
        %2412 = vst [vmem:[%s216 + $0x18] sm:$0xff] %v2336
        %2413 = vst [vmem:[%s216 + $0x20] sm:$0xff] %v2337
        %2414 = vst [vmem:[%s216 + $0x28] sm:$0xff] %v2338
        %2415 = vst [vmem:[%s216 + $0x30] sm:$0xff] %v2339
        %2416 = vst [vmem:[%s216 + $0x38] sm:$0xff] %v2340
        %2417 = vst [vmem:[%s216 + $0x40] sm:$0xff] %v2341
        %2418 = vst [vmem:[%s216 + $0x48] sm:$0xff] %v2342
        %2419 = vst [vmem:[%s216 + $0x50] sm:$0xff] %v2343
        %2420 = vst [vmem:[%s216 + $0x58] sm:$0xff] %v2344
        %2421 = vst [vmem:[%s216 + $0x60] sm:$0xff] %v2345
        %2422 = vst [vmem:[%s216 + $0x68] sm:$0xff] %v2346
        %2423 = vst [vmem:[%s216 + $0x70] sm:$0xff] %v2347
        %2424 = vst [vmem:[%s216 + $0x78] sm:$0xff] %v2348
        %2425 = vst [vmem:[%s216 + $0x80] sm:$0xff] %v2349
        %2426 = vst [vmem:[%s216 + $0x88] sm:$0xff] %v2350
        %2427 = vst [vmem:[%s216 + $0x90] sm:$0xff] %v2351
        %2428 = vst [vmem:[%s216 + $0x98] sm:$0xff] %v2352
        %2429 = vst [vmem:[%s216 + $0xa0] sm:$0xff] %v2353
        %2430 = vst [vmem:[%s216 + $0xa8] sm:$0xff] %v2354
        %2431 = vst [vmem:[%s216 + $0xb0] sm:$0xff] %v2355
        %2432 = vst [vmem:[%s216 + $0xb8] sm:$0xff] %v2356
        %2433 = vst [vmem:[%s216 + $0xc0] sm:$0xff] %v2357
        %2434 = vst [vmem:[%s216 + $0xc8] sm:$0xff] %v2358
        %2435 = vst [vmem:[%s216 + $0xd0] sm:$0xff] %v2359
        %2436 = vst [vmem:[%s216 + $0xd8] sm:$0xff] %v2360
        %2437 = vst [vmem:[%s216 + $0xe0] sm:$0xff] %v2361
        %2438 = vst [vmem:[%s216 + $0xe8] sm:$0xff] %v2362
        %2439 = vst [vmem:[%s216 + $0xf0] sm:$0xff] %v2363
        %2440 = vst [vmem:[%s216 + $0xf8] sm:$0xff] %v2364
        %2441 = vst [vmem:[%s216 + $0x100] sm:$0xff] %v2365
        %2442 = vst [vmem:[%s216 + $0x108] sm:$0xff] %v2366
        %2443 = vst [vmem:[%s216 + $0x110] sm:$0xff] %v2367
        %2444 = vst [vmem:[%s216 + $0x118] sm:$0xff] %v2368
        %2445 = vst [vmem:[%s216 + $0x120] sm:$0xff] %v2369
        %2446 = vst [vmem:[%s216 + $0x128] sm:$0xff] %v2370
        %2447 = vst [vmem:[%s216 + $0x130] sm:$0xff] %v2371
        %2448 = vst [vmem:[%s216 + $0x138] sm:$0xff] %v2372
        %2449 = vst [vmem:[%s216 + $0x140] sm:$0xff] %v2373
        %2450 = vst [vmem:[%s216 + $0x148] sm:$0xff] %v2374
        %2451 = vst [vmem:[%s216 + $0x150] sm:$0xff] %v2375
        %2452 = vst [vmem:[%s216 + $0x158] sm:$0xff] %v2376
        %2453 = vst [vmem:[%s216 + $0x160] sm:$0xff] %v2377
        %2454 = vst [vmem:[%s216 + $0x168] sm:$0xff] %v2378
        %2455 = vst [vmem:[%s216 + $0x170] sm:$0xff] %v2379
        %2456 = vst [vmem:[%s216 + $0x178] sm:$0xff] %v2380
        %2457 = vst [vmem:[%s216 + $0x180] sm:$0xff] %v2381
        %2458 = vst [vmem:[%s216 + $0x188] sm:$0xff] %v2382
        %2459 = vst [vmem:[%s216 + $0x190] sm:$0xff] %v2383
        %2460 = vst [vmem:[%s216 + $0x198] sm:$0xff] %v2384
        %2461 = vst [vmem:[%s216 + $0x1a0] sm:$0xff] %v2385
        %2462 = vst [vmem:[%s216 + $0x1a8] sm:$0xff] %v2386
        %2463 = vst [vmem:[%s216 + $0x1b0] sm:$0xff] %v2387
        %2464 = vst [vmem:[%s216 + $0x1b8] sm:$0xff] %v2388
        %2465 = vst [vmem:[%s216 + $0x1c0] sm:$0xff] %v2389
        %2466 = vst [vmem:[%s216 + $0x1c8] sm:$0xff] %v2390
        %2467 = vst [vmem:[%s216 + $0x1d0] sm:$0xff] %v2391
        %2468 = vst [vmem:[%s216 + $0x1d8] sm:$0xff] %v2392
        %2469 = vst [vmem:[%s216 + $0x1e0] sm:$0xff] %v2393
        %2470 = vst [vmem:[%s216 + $0x1e8] sm:$0xff] %v2394
        %2471 = vst [vmem:[%s216 + $0x1f0] sm:$0xff] %v2395
        %2472 = vst [vmem:[%s216 + $0x1f8] sm:$0xff] %v2396
        %2473 = vst [vmem:[%s216 + $0x200] sm:$0xff] %v2397
        %2474 = vst [vmem:[%s216 + $0x208] sm:$0xff] %v2398
        %2475 = vst [vmem:[%s216 + $0x210] sm:$0xff] %v2399
        %2476 = vst [vmem:[%s216 + $0x218] sm:$0xff] %v2400
        %2477 = vst [vmem:[%s216 + $0x220] sm:$0xff] %v2401
        %2478 = vst [vmem:[%s216 + $0x228] sm:$0xff] %v2402
        %2479 = vst [vmem:[%s216 + $0x230] sm:$0xff] %v2403
        %2480 = vst [vmem:[%s216 + $0x238] sm:$0xff] %v2404
        %2481 = vst [vmem:[%s216 + $0x240] sm:$0xff] %v2405
        %2482 = vst [vmem:[%s216 + $0x248] sm:$0xff] %v2406
        %2483 = vst [vmem:[%s216 + $0x250] sm:$0xff] %v2407
        %2484 = vst [vmem:[%s216 + $0x258] sm:$0xff] %v2408
        %s2485 = sand.u32 %s97, 1
        %s2486 = scalar_lea.sflag [#allocation4], %s2485
        %s2487 = sand.u32 %s97, 1
        %s2488 = smul.addr %s2487, 608
        %s2489 = scalar_lea.vmem [#allocation8], %s2488
        // Predicated region
        $region45: #{tpu_custom_call.1} parent=31 // pred_check
          %p2490 = pneg %p107
        $region46: #{tpu_custom_call.1} parent=31 // pred_check_branch
          %2492 = sbr.rel (%p2490) target = $region48
        $region47: #{tpu_custom_call.1} parent=31 // pred_region
          %s2493 = smul.u32 19, %s21
          %s2495 = ssub.s32 9728, 9728
          %2496 = vsyncadd %s2486, %s2495
          %s2497 = smul.addr %s2493, 4
          %s2498 = smul.addr %s2497, 128
          %s2499 = scalar_lea.hbm %s3, %s2498
          %s2500 = sshll.u32 %s2489, 4
          %s2501 = int_to_ptr.vmem [resolvable:$true] %s2500
          %2506 = dma.vmem_to_hbm [thread:$0]  %s2501, 9728, %s2499, %s2486, 512, 512, 32
        $region48: #{tpu_custom_call.1} parent=31 // pred_fallthru
          _
      $region32: #{tpu_custom_call.1} parent=5 // pred_fallthru
        _
      %p2507 = scmp.le.s32.totalorder 2, %s16
      // Predicated region
      $region49: #{tpu_custom_call.1} parent=5 // pred_check
        %p2508 = pneg %p2507
      $region50: #{tpu_custom_call.1} parent=5 // pred_check_branch
        %2510 = sbr.rel (%p2508) target = $region52
      $region51: #{tpu_custom_call.1} parent=5 // pred_region
        %s2511 = ssub.s32 %s16, 2
        // Predicated region
        $region53: #{tpu_custom_call.1} parent=51 // pred_check
          %p2512 = pneg %p113
        $region54: #{tpu_custom_call.1} parent=51 // pred_check_branch
          %2514 = sbr.rel (%p2512) target = $region56
        $region55: #{tpu_custom_call.1} parent=51 // pred_region
          %s2515 = sand.u32 %s98, 1
          %s2516 = scalar_lea.sflag [#allocation4], %s2515
          %s2517 = sand.u32 %s98, 1
          %s2518 = smul.addr %s2517, 608
          %s2519 = scalar_lea.vmem [#allocation8], %s2518
          %2520 = dma.done %s2516, 9728
        $region56: #{tpu_custom_call.1} parent=51 // pred_fallthru
          _
      $region52: #{tpu_custom_call.1} parent=5 // pred_fallthru
        _
    $region6: #{tpu_custom_call.1} parent=1 // loop_footer
      %s20 = sadd.s32 1, %s16
    $region7: #{tpu_custom_call.1} parent=1 // loop_footer_branch
      %15 = sbr.rel target = $region3
    $region8: #{tpu_custom_call.1} parent=1 // loop_exit
      _
    %2521 = vsyncpa [#allocation3], 1
    %s2522 = scalar_lea.sflag [#allocation3], 1
    %2523 = vsyncpa %s2522, 1
    %2524 = vsyncpa [#allocation6], 1
    %2525 = vsyncpa [#allocation4], 1
    %s2526 = scalar_lea.sflag [#allocation4], 1
    %2527 = vsyncpa %s2526, 1

</llo_original>
